<compile_context>
chip_gen: v7x
topology: tpu7x:2x2x1
jax: 0.10.0
libtpu: 0.0.40
codegen_flags: <defaults>
</compile_context>

<pallas_src>
import math

import jax
import jax.numpy as jnp
from jax.experimental import pallas as pl
from jax.experimental.pallas import tpu as pltpu

_LANE = 128
_BF16_SUBLANE = 16   # bf16 packs 2 rows per 32-bit sublane -> tile rows % 16 == 0


def _round_up(x, m):
    return ((x + m - 1) // m) * m


def _mlp_kernel(x_ref,
                w1_ref, b1_ref,
                w2_ref, b2_ref,
                w3_ref, b3_ref,
                w4_ref, b4_ref,
                w5_ref, b5_ref,
                o_ref):
    """Fused 4x(Linear+ReLU) + final Linear for one (block_m, D) batch tile.

    x and all weights arrive as bf16 (MXU-native); every matmul accumulates in
    f32 on the MXU; bias-add + ReLU stay in f32 on the VPU (v5e has no bf16
    VALU path), and the ReLU result is cast to bf16 once on store so the
    inter-layer activations cost half the VMEM traffic / vld-vst slots.
    Activations never leave VMEM between layers.
    """

    def layer(h_bf16, w_ref, b_ref, relu):
        acc = jnp.dot(h_bf16, w_ref[...], preferred_element_type=jnp.float32)
        acc = acc + b_ref[...]                                  # f32 epilogue (VPU)
        if relu:
            return jnp.maximum(acc, 0.0).astype(jnp.bfloat16)   # single cast-on-store
        return acc

    h = x_ref[...]                                              # already bf16
    h = layer(h, w1_ref, b1_ref, True)
    h = layer(h, w2_ref, b2_ref, True)
    h = layer(h, w3_ref, b3_ref, True)
    h = layer(h, w4_ref, b4_ref, True)
    o_ref[...] = layer(h, w5_ref, b5_ref, False).astype(o_ref.dtype)


def _vmem_cap_bytes():
    """Generation-aware VMEM request cap: ~75% of physical per-core VMEM.

    v7x has 64 MiB/TC -> ~48 MiB (leaves compiler scratch/spill headroom);
    v5e/v6e have 128 MiB -> ~96 MiB. This is a capability probe only -- the
    conservative fallback is used if the query is unavailable; it never wraps
    or masks the kernel call itself.
    """
    phys = 64 * 1024 * 1024
    if hasattr(pltpu, "get_tpu_info"):
        try:
            phys = int(pltpu.get_tpu_info().vmem_capacity_bytes)
        except Exception:
            pass  # keep conservative default
    return (phys * 3) // 4


def mlp_forward(x, params, *, block_m=256):
    """Forward pass of the PyTorch MLP.

    x: (B, C, H, W) or (B, D) float32.
    params: list of 5 (W[in, out], b[1, out]) float32 pairs.
    Returns (B, num_classes) float32 logits.
    """
    input_size = params[0][0].shape[0]
    nf = params[0][0].shape[1]
    num_classes = params[-1][0].shape[1]

    # == x.view(-1, input_size); cast once to bf16 in the wrapper -- the kernel
    # consumes x as bf16 anyway, so numerics are unchanged but HBM->VMEM DMA
    # and the double-buffered x tile are halved.
    x2d = x.reshape(-1, input_size).astype(jnp.bfloat16)
    B = x2d.shape[0]

    # --- batch tiling ---------------------------------------------------------
    # bf16 rows pack 2-per-sublane -> block_m must be a multiple of 16.
    # Guarantee >= 2 grid steps whenever the batch permits: a 1-step "parallel"
    # grid leaves one v7x TensorCore idle and disables DMA/compute overlap on
    # every generation.
    block_m = _round_up(max(1, min(block_m, B)), _BF16_SUBLANE)
    two_step_cap = _round_up(B, _BF16_SUBLANE)
    if two_step_cap >= 2 * _BF16_SUBLANE:
        two_step_cap = _round_up(two_step_cap // 2, _BF16_SUBLANE)
    block_m = min(block_m, two_step_cap)
    B_pad = _round_up(B, block_m)
    if B_pad != B:
        x2d = jnp.pad(x2d, ((0, B_pad - B), (0, 0)))
    grid = (B_pad // block_m,)

    # --- lane-dense classifier head: pad N up to a multiple of 128 -------------
    N_pad = _round_up(max(num_classes, _LANE), _LANE)

    flat_params = []
    for li, (w, b) in enumerate(params):
        b = b.reshape(1, -1)
        if li == len(params) - 1 and N_pad != num_classes:
            w = jnp.pad(w, ((0, 0), (0, N_pad - num_classes)))
            b = jnp.pad(b, ((0, 0), (0, N_pad - num_classes)))
        flat_params.append(w.astype(jnp.bfloat16))   # MXU-native weights
        flat_params.append(b.astype(jnp.float32))    # f32 bias for the VPU add

    # Advisory cost hint so XLA schedules around the custom call sensibly.
    flops = 2 * B_pad * (input_size * nf + 3 * nf * nf + nf * N_pad)
    param_bytes = sum(int(p.size) * p.dtype.itemsize for p in flat_params)
    bytes_accessed = (int(x2d.size) * x2d.dtype.itemsize
                      + B_pad * N_pad * 2            # bf16 logits writeback
                      + param_bytes)
    cost = pl.CostEstimate(flops=int(flops), transcendentals=0,
                           bytes_accessed=int(bytes_accessed))

    # VMEM request: double-buffered bf16 x / logits tiles, double-buffered
    # (but grid-invariant, so only DMA'd once) weights, plus activation slabs,
    # with 2x headroom -- capped generation-aware below physical VMEM.
    act_bytes = block_m * max(input_size, nf, N_pad) * 4
    vmem_needed = (2 * block_m * input_size * 2      # bf16 x tiles
                   + 2 * block_m * N_pad * 2         # bf16 logits tiles
                   + 2 * param_bytes                 # resident weights/biases
                   + 4 * act_bytes)                  # inter-layer slabs
    vmem_limit = int(min(max(2 * vmem_needed, 32 * 1024 * 1024), _vmem_cap_bytes()))

    in_specs = [pl.BlockSpec((block_m, input_size), lambda i: (i, 0))]
    for p in flat_params:
        # Grid-invariant block (index_map always (0, 0)): Pallas only DMAs it
        # once, so the default spec costs VMEM footprint only. The previous
        # Buffered(1) + broad `except Exception` fallback is intentionally
        # removed for a deterministic, non-masking call path.
        in_specs.append(pl.BlockSpec(p.shape, lambda i: (0, 0)))

    out = pl.pallas_call(
        _mlp_kernel,
        out_shape=jax.ShapeDtypeStruct((B_pad, N_pad), jnp.bfloat16),
        grid_spec=pltpu.PrefetchScalarGridSpec(
            num_scalar_prefetch=0,
            grid=grid,
            in_specs=in_specs,
            out_specs=pl.BlockSpec((block_m, N_pad), lambda i: (i, 0)),
        ),
        compiler_params=pltpu.CompilerParams(
            dimension_semantics=("parallel",),
            vmem_limit_bytes=vmem_limit),
        cost_estimate=cost,
    )(x2d, *flat_params)

    # Slice off batch padding + the zero-padded head columns; return f32 logits
    # like the PyTorch module.
    return out[:B, :num_classes].astype(jnp.float32)


def init_params(key, input_size, nf, num_classes):
    """Deterministic init mimicking nn.Linear default U(-1/sqrt(fan_in), +...)."""
    dims = [(input_size, nf), (nf, nf), (nf, nf), (nf, nf), (nf, num_classes)]
    params = []
    for fan_in, fan_out in dims:
        kw, kb, key = jax.random.split(key, 3)
        bound = 1.0 / math.sqrt(fan_in)
        w = jax.random.uniform(kw, (fan_in, fan_out), jnp.float32, -bound, bound)
        b = jax.random.uniform(kb, (1, fan_out), jnp.float32, -bound, bound)
        params.append((w, b))
    return params


def mlp_reference(x, params, *, mixed=False):
    """Plain-JAX reference of the PyTorch forward pass.

    mixed=True mirrors the kernel's precision exactly: bf16 x / weights /
    inter-layer activations / logits, f32 accumulation and f32 epilogue.
    """
    input_size = params[0][0].shape[0]
    h = x.reshape(-1, input_size).astype(jnp.float32)
    if mixed:
        h = h.astype(jnp.bfloat16)
    last = len(params) - 1
    for li, (w, b) in enumerate(params):
        w_cast = w.astype(jnp.bfloat16) if mixed else w
        acc = jnp.dot(h, w_cast, preferred_element_type=jnp.float32) + b.reshape(1, -1)
        if li < last:
            acc = jnp.maximum(acc, 0.0)
            h = acc.astype(jnp.bfloat16) if mixed else acc
        else:
            h = acc
    if mixed:
        h = h.astype(jnp.bfloat16)   # match the bf16 logits writeback
    return h.astype(jnp.float32)


if __name__ == "__main__":
    # Small shapes consistent with the module: flatten C*H*W -> input_size.
    B, C, H, W = 128, 1, 16, 16        # input_size = 256
    nf = 256
    num_classes = 10

    key = jax.random.PRNGKey(0)
    kx, kp = jax.random.split(key)
    x = jax.random.normal(kx, (B, C, H, W), jnp.float32)
    params = init_params(kp, C * H * W, nf, num_classes)

    out = mlp_forward(x, params)       # block_m clamps to 64 -> grid = (2,)
    out = jax.block_until_ready(out)
    assert out.shape == (B, num_classes)

    # Compare against a reference with the exact same mixed precision.
    ref_mixed = mlp_reference(x, params, mixed=True)
    assert jnp.allclose(out, ref_mixed, atol=2e-2, rtol=2e-2), \
        float(jnp.max(jnp.abs(out - ref_mixed)))

    # Sanity check against the full-f32 PyTorch-equivalent forward (tolerance
    # loosened because the kernel uses bf16 weights/activations/logits).
    ref_f32 = mlp_reference(x, params, mixed=False)
    assert jnp.allclose(out, ref_f32, atol=1.5e-1, rtol=1e-1), \
        float(jnp.max(jnp.abs(out - ref_f32)))

    print("KERNEL_OK")
</pallas_src>

<mosaic_0001>
module attributes {stable_mosaic.version = 11 : i64} {
  func.func @_mlp_kernel(%arg0: i32, %arg1: memref<64x256xbf16, #tpu.memory_space<vmem>>, %arg2: memref<256x256xbf16, #tpu.memory_space<vmem>>, %arg3: memref<1x256xf32, #tpu.memory_space<vmem>>, %arg4: memref<256x256xbf16, #tpu.memory_space<vmem>>, %arg5: memref<1x256xf32, #tpu.memory_space<vmem>>, %arg6: memref<256x256xbf16, #tpu.memory_space<vmem>>, %arg7: memref<1x256xf32, #tpu.memory_space<vmem>>, %arg8: memref<256x256xbf16, #tpu.memory_space<vmem>>, %arg9: memref<1x256xf32, #tpu.memory_space<vmem>>, %arg10: memref<256x128xbf16, #tpu.memory_space<vmem>>, %arg11: memref<1x128xf32, #tpu.memory_space<vmem>>, %arg12: memref<64x128xbf16, #tpu.memory_space<vmem>>) attributes {dimension_semantics = [#tpu.dimension_semantics<parallel>], iteration_bounds = array<i64: 2>, scalar_prefetch = 0 : i64, scratch_operands = 0 : i64, tpu.core_type = #tpu.core_type<tc>, window_params = [{transform_indices = @transform_0, window_bounds = array<i64: 64, 256>}, {pipeline_mode = #tpu.pipeline_mode<synchronous>, transform_indices = @transform_1, window_bounds = array<i64: 256, 256>}, {pipeline_mode = #tpu.pipeline_mode<synchronous>, transform_indices = @transform_2, window_bounds = array<i64: 1, 256>}, {pipeline_mode = #tpu.pipeline_mode<synchronous>, transform_indices = @transform_3, window_bounds = array<i64: 256, 256>}, {pipeline_mode = #tpu.pipeline_mode<synchronous>, transform_indices = @transform_4, window_bounds = array<i64: 1, 256>}, {pipeline_mode = #tpu.pipeline_mode<synchronous>, transform_indices = @transform_5, window_bounds = array<i64: 256, 256>}, {pipeline_mode = #tpu.pipeline_mode<synchronous>, transform_indices = @transform_6, window_bounds = array<i64: 1, 256>}, {pipeline_mode = #tpu.pipeline_mode<synchronous>, transform_indices = @transform_7, window_bounds = array<i64: 256, 256>}, {pipeline_mode = #tpu.pipeline_mode<synchronous>, transform_indices = @transform_8, window_bounds = array<i64: 1, 256>}, {pipeline_mode = #tpu.pipeline_mode<synchronous>, transform_indices = @transform_9, window_bounds = array<i64: 256, 128>}, {pipeline_mode = #tpu.pipeline_mode<synchronous>, transform_indices = @transform_10, window_bounds = array<i64: 1, 128>}, {transform_indices = @transform_11, window_bounds = array<i64: 64, 128>}]} {
    %c0 = arith.constant 0 : index
    %c0_0 = arith.constant 0 : index
    %0 = vector.load %arg1[%c0, %c0_0] : memref<64x256xbf16, #tpu.memory_space<vmem>>, vector<64x256xbf16>
    %c0_1 = arith.constant 0 : index
    %c0_2 = arith.constant 0 : index
    %1 = vector.load %arg2[%c0_1, %c0_2] : memref<256x256xbf16, #tpu.memory_space<vmem>>, vector<256x256xbf16>
    %cst = arith.constant dense<0.000000e+00> : vector<64x256xf32>
    %2 = tpu.matmul %0, %1, %cst {dimension_numbers = #tpu.dot_dimension_numbers<[1], [0], [0], [1], [0, 0, 1, 1], [], []>} : vector<64x256xbf16>, vector<256x256xbf16>, vector<64x256xf32> -> vector<64x256xf32>
    %c0_3 = arith.constant 0 : index
    %c0_4 = arith.constant 0 : index
    %3 = vector.load %arg3[%c0_3, %c0_4] : memref<1x256xf32, #tpu.memory_space<vmem>>, vector<1x256xf32>
    %4 = vector.broadcast %3 : vector<1x256xf32> to vector<64x256xf32>
    %5 = arith.addf %2, %4 : vector<64x256xf32>
    %cst_5 = arith.constant 0.000000e+00 : f32
    %6 = vector.broadcast %cst_5 : f32 to vector<64x256xf32>
    %7 = arith.maximumf %5, %6 : vector<64x256xf32>
    %8 = arith.truncf %7 : vector<64x256xf32> to vector<64x256xbf16>
    %c0_6 = arith.constant 0 : index
    %c0_7 = arith.constant 0 : index
    %9 = vector.load %arg4[%c0_6, %c0_7] : memref<256x256xbf16, #tpu.memory_space<vmem>>, vector<256x256xbf16>
    %cst_8 = arith.constant dense<0.000000e+00> : vector<64x256xf32>
    %10 = tpu.matmul %8, %9, %cst_8 {dimension_numbers = #tpu.dot_dimension_numbers<[1], [0], [0], [1], [0, 0, 1, 1], [], []>} : vector<64x256xbf16>, vector<256x256xbf16>, vector<64x256xf32> -> vector<64x256xf32>
    %c0_9 = arith.constant 0 : index
    %c0_10 = arith.constant 0 : index
    %11 = vector.load %arg5[%c0_9, %c0_10] : memref<1x256xf32, #tpu.memory_space<vmem>>, vector<1x256xf32>
    %12 = vector.broadcast %11 : vector<1x256xf32> to vector<64x256xf32>
    %13 = arith.addf %10, %12 : vector<64x256xf32>
    %cst_11 = arith.constant 0.000000e+00 : f32
    %14 = vector.broadcast %cst_11 : f32 to vector<64x256xf32>
    %15 = arith.maximumf %13, %14 : vector<64x256xf32>
    %16 = arith.truncf %15 : vector<64x256xf32> to vector<64x256xbf16>
    %c0_12 = arith.constant 0 : index
    %c0_13 = arith.constant 0 : index
    %17 = vector.load %arg6[%c0_12, %c0_13] : memref<256x256xbf16, #tpu.memory_space<vmem>>, vector<256x256xbf16>
    %cst_14 = arith.constant dense<0.000000e+00> : vector<64x256xf32>
    %18 = tpu.matmul %16, %17, %cst_14 {dimension_numbers = #tpu.dot_dimension_numbers<[1], [0], [0], [1], [0, 0, 1, 1], [], []>} : vector<64x256xbf16>, vector<256x256xbf16>, vector<64x256xf32> -> vector<64x256xf32>
    %c0_15 = arith.constant 0 : index
    %c0_16 = arith.constant 0 : index
    %19 = vector.load %arg7[%c0_15, %c0_16] : memref<1x256xf32, #tpu.memory_space<vmem>>, vector<1x256xf32>
    %20 = vector.broadcast %19 : vector<1x256xf32> to vector<64x256xf32>
    %21 = arith.addf %18, %20 : vector<64x256xf32>
    %cst_17 = arith.constant 0.000000e+00 : f32
    %22 = vector.broadcast %cst_17 : f32 to vector<64x256xf32>
    %23 = arith.maximumf %21, %22 : vector<64x256xf32>
    %24 = arith.truncf %23 : vector<64x256xf32> to vector<64x256xbf16>
    %c0_18 = arith.constant 0 : index
    %c0_19 = arith.constant 0 : index
    %25 = vector.load %arg8[%c0_18, %c0_19] : memref<256x256xbf16, #tpu.memory_space<vmem>>, vector<256x256xbf16>
    %cst_20 = arith.constant dense<0.000000e+00> : vector<64x256xf32>
    %26 = tpu.matmul %24, %25, %cst_20 {dimension_numbers = #tpu.dot_dimension_numbers<[1], [0], [0], [1], [0, 0, 1, 1], [], []>} : vector<64x256xbf16>, vector<256x256xbf16>, vector<64x256xf32> -> vector<64x256xf32>
    %c0_21 = arith.constant 0 : index
    %c0_22 = arith.constant 0 : index
    %27 = vector.load %arg9[%c0_21, %c0_22] : memref<1x256xf32, #tpu.memory_space<vmem>>, vector<1x256xf32>
    %28 = vector.broadcast %27 : vector<1x256xf32> to vector<64x256xf32>
    %29 = arith.addf %26, %28 : vector<64x256xf32>
    %cst_23 = arith.constant 0.000000e+00 : f32
    %30 = vector.broadcast %cst_23 : f32 to vector<64x256xf32>
    %31 = arith.maximumf %29, %30 : vector<64x256xf32>
    %32 = arith.truncf %31 : vector<64x256xf32> to vector<64x256xbf16>
    %c0_24 = arith.constant 0 : index
    %c0_25 = arith.constant 0 : index
    %33 = vector.load %arg10[%c0_24, %c0_25] : memref<256x128xbf16, #tpu.memory_space<vmem>>, vector<256x128xbf16>
    %cst_26 = arith.constant dense<0.000000e+00> : vector<64x128xf32>
    %34 = tpu.matmul %32, %33, %cst_26 {dimension_numbers = #tpu.dot_dimension_numbers<[1], [0], [0], [1], [0, 0, 1, 1], [], []>} : vector<64x256xbf16>, vector<256x128xbf16>, vector<64x128xf32> -> vector<64x128xf32>
    %c0_27 = arith.constant 0 : index
    %c0_28 = arith.constant 0 : index
    %35 = vector.load %arg11[%c0_27, %c0_28] : memref<1x128xf32, #tpu.memory_space<vmem>>, vector<1x128xf32>
    %36 = vector.broadcast %35 : vector<1x128xf32> to vector<64x128xf32>
    %37 = arith.addf %34, %36 : vector<64x128xf32>
    %38 = arith.truncf %37 : vector<64x128xf32> to vector<64x128xbf16>
    %c0_29 = arith.constant 0 : index
    %c0_30 = arith.constant 0 : index
    %39 = vector.load %arg12[%c0_29, %c0_30] : memref<64x128xbf16, #tpu.memory_space<vmem>>, vector<64x128xbf16>
    tpu.vector_store %arg12[%c0_29, %c0_30], %38 {strides = array<i32>} : memref<64x128xbf16, #tpu.memory_space<vmem>>, vector<64x128xbf16>,
    return
  }
  func.func @transform_0(%arg0: i32) -> (i32, i32) {
    %c0_i32 = arith.constant 0 : i32
    %c0_i32_0 = arith.constant 0 : i32
    return %arg0, %c0_i32 : i32, i32
  }
  func.func @transform_1(%arg0: i32) -> (i32, i32) {
    %c0_i32 = arith.constant 0 : i32
    %c0_i32_0 = arith.constant 0 : i32
    %c0_i32_1 = arith.constant 0 : i32
    return %c0_i32, %c0_i32_0 : i32, i32
  }
  func.func @transform_2(%arg0: i32) -> (i32, i32) {
    %c0_i32 = arith.constant 0 : i32
    %c0_i32_0 = arith.constant 0 : i32
    %c0_i32_1 = arith.constant 0 : i32
    return %c0_i32, %c0_i32_0 : i32, i32
  }
  func.func @transform_3(%arg0: i32) -> (i32, i32) {
    %c0_i32 = arith.constant 0 : i32
    %c0_i32_0 = arith.constant 0 : i32
    %c0_i32_1 = arith.constant 0 : i32
    return %c0_i32, %c0_i32_0 : i32, i32
  }
  func.func @transform_4(%arg0: i32) -> (i32, i32) {
    %c0_i32 = arith.constant 0 : i32
    %c0_i32_0 = arith.constant 0 : i32
    %c0_i32_1 = arith.constant 0 : i32
    return %c0_i32, %c0_i32_0 : i32, i32
  }
  func.func @transform_5(%arg0: i32) -> (i32, i32) {
    %c0_i32 = arith.constant 0 : i32
    %c0_i32_0 = arith.constant 0 : i32
    %c0_i32_1 = arith.constant 0 : i32
    return %c0_i32, %c0_i32_0 : i32, i32
  }
  func.func @transform_6(%arg0: i32) -> (i32, i32) {
    %c0_i32 = arith.constant 0 : i32
    %c0_i32_0 = arith.constant 0 : i32
    %c0_i32_1 = arith.constant 0 : i32
    return %c0_i32, %c0_i32_0 : i32, i32
  }
  func.func @transform_7(%arg0: i32) -> (i32, i32) {
    %c0_i32 = arith.constant 0 : i32
    %c0_i32_0 = arith.constant 0 : i32
    %c0_i32_1 = arith.constant 0 : i32
    return %c0_i32, %c0_i32_0 : i32, i32
  }
  func.func @transform_8(%arg0: i32) -> (i32, i32) {
    %c0_i32 = arith.constant 0 : i32
    %c0_i32_0 = arith.constant 0 : i32
    %c0_i32_1 = arith.constant 0 : i32
    return %c0_i32, %c0_i32_0 : i32, i32
  }
  func.func @transform_9(%arg0: i32) -> (i32, i32) {
    %c0_i32 = arith.constant 0 : i32
    %c0_i32_0 = arith.constant 0 : i32
    %c0_i32_1 = arith.constant 0 : i32
    return %c0_i32, %c0_i32_0 : i32, i32
  }
  func.func @transform_10(%arg0: i32) -> (i32, i32) {
    %c0_i32 = arith.constant 0 : i32
    %c0_i32_0 = arith.constant 0 : i32
    %c0_i32_1 = arith.constant 0 : i32
    return %c0_i32, %c0_i32_0 : i32, i32
  }
  func.func @transform_11(%arg0: i32) -> (i32, i32) {
    %c0_i32 = arith.constant 0 : i32
    %c0_i32_0 = arith.constant 0 : i32
    return %arg0, %c0_i32 : i32, i32
  }
}

</mosaic_0001>

<llo_original>
// kernel: tpu_custom_call.1
$region0: #{tpu_custom_call.1}
  #allocation0 [shape = 'u32[]', space=smem, size = 0x4, offset = 0x4, fixed_abs, tag = 'smem constant byte address 0x4 - core index']
  #allocation1 [shape = 'u32[144,128]{1,0:T(1,128)}', space=vmem, size = 0x12000, scoped, tag = 'internal scratch']
  %s0 = inlined_call_operand.hbm [shape: bf16[128,256], index: 0, kind: input, shape index: {}]
  %s1 = inlined_call_operand.hbm [shape: bf16[256,256], index: 1, kind: input, shape index: {}]
  %s2 = inlined_call_operand.vmem [shape: f32[1,256], index: 2, kind: input, shape index: {}]
  %s3 = inlined_call_operand.hbm [shape: bf16[256,256], index: 3, kind: input, shape index: {}]
  %s4 = inlined_call_operand.vmem [shape: f32[1,256], index: 4, kind: input, shape index: {}]
  %s5 = inlined_call_operand.hbm [shape: bf16[256,256], index: 5, kind: input, shape index: {}]
  %s6 = inlined_call_operand.vmem [shape: f32[1,256], index: 6, kind: input, shape index: {}]
  %s7 = inlined_call_operand.hbm [shape: bf16[256,256], index: 7, kind: input, shape index: {}]
  %s8 = inlined_call_operand.vmem [shape: f32[1,256], index: 8, kind: input, shape index: {}]
  %s9 = inlined_call_operand.hbm [shape: bf16[256,128], index: 9, kind: input, shape index: {}]
  %s10 = inlined_call_operand.vmem [shape: f32[1,128], index: 10, kind: input, shape index: {}]
  %s11 = inlined_call_operand.hbm [shape: bf16[128,128], index: 11, kind: output, shape index: {}]
  %s12 = sld [smem:[#allocation0]]
  $region101: #{tpu_custom_call.1} parent=0
    _
  %s14 = ssub.s32 1, %s12
  %s15 = scalar_select 0, %s14, %s12
  $region1: #{tpu_custom_call.1} parent=0
    #allocation2 [shape = 'u8[65536]{0}', space=vmem, size = 0x10000, scoped, tag = 'input window, operand 0']
    #allocation3 [shape = 's32[2]{0}', space=sflag, size = 0x8, scoped, tag = 'scoped memory for tpu_custom_call.1']
    #allocation4 [shape = 's32[2]{0}', space=sflag, size = 0x8, scoped, tag = 'scoped memory for tpu_custom_call.1']
    #allocation5 [shape = 'u8[131072]{0}', space=vmem, size = 0x20000, scoped, tag = 'input window, operand 1, single buffered']
    #allocation6 [shape = 's32[1]{0}', space=sflag, size = 0x4, scoped, tag = 'scoped memory for tpu_custom_call.1']
    #allocation7 [shape = 'u8[131072]{0}', space=vmem, size = 0x20000, scoped, tag = 'input window, operand 3, single buffered']
    #allocation8 [shape = 'u8[131072]{0}', space=vmem, size = 0x20000, scoped, tag = 'input window, operand 5, single buffered']
    #allocation9 [shape = 's32[1]{0}', space=sflag, size = 0x4, scoped, tag = 'scoped memory for tpu_custom_call.1']
    #allocation10 [shape = 'u8[131072]{0}', space=vmem, size = 0x20000, scoped, tag = 'input window, operand 7, single buffered']
    #allocation11 [shape = 'u8[65536]{0}', space=vmem, size = 0x10000, scoped, tag = 'input window, operand 9, single buffered']
    #allocation12 [shape = 's32[1]{0}', space=sflag, size = 0x4, scoped, tag = 'scoped memory for tpu_custom_call.1']
    #allocation13 [shape = 'u8[32768]{0}', space=vmem, size = 0x8000, scoped, tag = 'output window, operand 0']
    %16 = vsyncpa [#allocation3], 0
    %s17 = scalar_lea.sflag [#allocation3], 1
    %18 = vsyncpa %s17, 0
    %19 = vsyncpa [#allocation6], 0
    %20 = vsyncpa [#allocation9], 0
    %21 = vsyncpa [#allocation12], 0
    %22 = vsyncpa [#allocation4], 0
    %s23 = scalar_lea.sflag [#allocation4], 1
    %24 = vsyncpa %s23, 0
    loop: start=0, step=1, limit=4
    $region2: #{tpu_custom_call.1} parent=1 // loop_pre_header
      _
    $region3: #{tpu_custom_call.1} parent=1 // loop_header
      %s26 = sphi 0, %s30
      %p27 = scmp.ge.s32.totalorder %s26, 4
      %s36 = sphi 0, %s38
      %s39 = sphi 0, %s36
      %s40 = sphi 0, %s39
      %s56 = sphi 0, %s40
      %s60 = sphi 0, %s60
      %s62 = sphi 0, %s60
      %s63 = sphi 0, %s62
      %s77 = sphi 0, %s63
      %s81 = sphi 0, %s81
      %s83 = sphi 0, %s81
      %s84 = sphi 0, %s83
      %s98 = sphi 0, %s84
      %s102 = sphi 0, %s102
      %s104 = sphi 0, %s102
      %s105 = sphi 0, %s104
      %s119 = sphi 0, %s105
      %s123 = sphi 0, %s123
      %s125 = sphi 0, %s123
      %s126 = sphi 0, %s125
      %s140 = sphi 0, %s126
      %s144 = sphi 0, %s144
      %s146 = sphi 0, %s144
      %s147 = sphi 0, %s146
      %s161 = sphi 0, %s147
      %s165 = sphi 0, %s165
      %s167 = sphi 0, %s165
      %s168 = sphi 0, %s167
      %s182 = sphi 0, %s168
      %s186 = sphi 0, %s186
      %s188 = sphi 0, %s186
      %s189 = sphi 0, %s188
      %s203 = sphi 0, %s189
      %s207 = sphi 0, %s207
      %s209 = sphi 0, %s207
      %s210 = sphi 0, %s209
      %s224 = sphi 0, %s210
      %s228 = sphi 0, %s228
      %s230 = sphi 0, %s228
      %s231 = sphi 0, %s230
      %s245 = sphi 0, %s231
      %s249 = sphi 0, %s249
      %s251 = sphi 0, %s249
      %s252 = sphi 0, %s251
      %s266 = sphi 0, %s252
      %s272 = sphi 0, %s274
      %s275 = sphi 0, %s272
      %s276 = sphi 0, %s275
      %s292 = sphi 0, %s276
    $region4: #{tpu_custom_call.1} parent=1 // loop_header_branch
      %29 = sbr.rel (%p27) target = $region8
    $region5: #{tpu_custom_call.1} parent=1 // loop_body
      %s31 = ssub.s32 %s26, 1
      %s32 = ssub.s32 %s26, 2
      %s33 = sadd.s32 %s26, 1
      %s34 = ssub.s32 %s26, %s33
      %p35 = scmp.eq.s32.totalorder %s34, 0
      %s37 = sadd.s32 %s36, 1
      %s38 = scalar_select %p35, %s36, %s37
      %p41 = pneg %p35
      %p42 = scmp.eq.s32.totalorder %s26, 1
      %p43 = por %p41, %p42
      %p44 = scmp.ne.s32.totalorder %s36, %s39
      %p45 = scmp.eq.s32.totalorder %s26, 0
      %p46 = por %p44, %p45
      %p47 = scmp.ne.s32.totalorder %s36, %s39
      %p48 = scmp.eq.s32.totalorder %s31, 1
      %p49 = por %p47, %p48
      %p50 = scmp.ne.s32.totalorder %s39, %s40
      %p51 = scmp.eq.s32.totalorder %s31, 0
      %p52 = por %p50, %p51
      %p53 = scmp.ne.s32.totalorder %s39, %s40
      %p54 = scmp.eq.s32.totalorder %s32, 1
      %p55 = por %p53, %p54
      %p57 = scmp.ne.s32.totalorder %s40, %s56
      %p58 = scmp.eq.s32.totalorder %s32, 0
      %p59 = por %p57, %p58
      %s61 = sadd.s32 %s60, 1
      %p64 = scmp.eq.s32.totalorder %s26, 1
      %p65 = scmp.ne.s32.totalorder %s60, %s62
      %p66 = scmp.eq.s32.totalorder %s26, 0
      %p67 = por %p65, %p66
      %p68 = scmp.ne.s32.totalorder %s60, %s62
      %p69 = scmp.eq.s32.totalorder %s31, 1
      %p70 = por %p68, %p69
      %p71 = scmp.ne.s32.totalorder %s62, %s63
      %p72 = scmp.eq.s32.totalorder %s31, 0
      %p73 = por %p71, %p72
      %p74 = scmp.ne.s32.totalorder %s62, %s63
      %p75 = scmp.eq.s32.totalorder %s32, 1
      %p76 = por %p74, %p75
      %p78 = scmp.ne.s32.totalorder %s63, %s77
      %p79 = scmp.eq.s32.totalorder %s32, 0
      %p80 = por %p78, %p79
      %s82 = sadd.s32 %s81, 1
      %p85 = scmp.eq.s32.totalorder %s26, 1
      %p86 = scmp.ne.s32.totalorder %s81, %s83
      %p87 = scmp.eq.s32.totalorder %s26, 0
      %p88 = por %p86, %p87
      %p89 = scmp.ne.s32.totalorder %s81, %s83
      %p90 = scmp.eq.s32.totalorder %s31, 1
      %p91 = por %p89, %p90
      %p92 = scmp.ne.s32.totalorder %s83, %s84
      %p93 = scmp.eq.s32.totalorder %s31, 0
      %p94 = por %p92, %p93
      %p95 = scmp.ne.s32.totalorder %s83, %s84
      %p96 = scmp.eq.s32.totalorder %s32, 1
      %p97 = por %p95, %p96
      %p99 = scmp.ne.s32.totalorder %s84, %s98
      %p100 = scmp.eq.s32.totalorder %s32, 0
      %p101 = por %p99, %p100
      %s103 = sadd.s32 %s102, 1
      %p106 = scmp.eq.s32.totalorder %s26, 1
      %p107 = scmp.ne.s32.totalorder %s102, %s104
      %p108 = scmp.eq.s32.totalorder %s26, 0
      %p109 = por %p107, %p108
      %p110 = scmp.ne.s32.totalorder %s102, %s104
      %p111 = scmp.eq.s32.totalorder %s31, 1
      %p112 = por %p110, %p111
      %p113 = scmp.ne.s32.totalorder %s104, %s105
      %p114 = scmp.eq.s32.totalorder %s31, 0
      %p115 = por %p113, %p114
      %p116 = scmp.ne.s32.totalorder %s104, %s105
      %p117 = scmp.eq.s32.totalorder %s32, 1
      %p118 = por %p116, %p117
      %p120 = scmp.ne.s32.totalorder %s105, %s119
      %p121 = scmp.eq.s32.totalorder %s32, 0
      %p122 = por %p120, %p121
      %s124 = sadd.s32 %s123, 1
      %p127 = scmp.eq.s32.totalorder %s26, 1
      %p128 = scmp.ne.s32.totalorder %s123, %s125
      %p129 = scmp.eq.s32.totalorder %s26, 0
      %p130 = por %p128, %p129
      %p131 = scmp.ne.s32.totalorder %s123, %s125
      %p132 = scmp.eq.s32.totalorder %s31, 1
      %p133 = por %p131, %p132
      %p134 = scmp.ne.s32.totalorder %s125, %s126
      %p135 = scmp.eq.s32.totalorder %s31, 0
      %p136 = por %p134, %p135
      %p137 = scmp.ne.s32.totalorder %s125, %s126
      %p138 = scmp.eq.s32.totalorder %s32, 1
      %p139 = por %p137, %p138
      %p141 = scmp.ne.s32.totalorder %s126, %s140
      %p142 = scmp.eq.s32.totalorder %s32, 0
      %p143 = por %p141, %p142
      %s145 = sadd.s32 %s144, 1
      %p148 = scmp.eq.s32.totalorder %s26, 1
      %p149 = scmp.ne.s32.totalorder %s144, %s146
      %p150 = scmp.eq.s32.totalorder %s26, 0
      %p151 = por %p149, %p150
      %p152 = scmp.ne.s32.totalorder %s144, %s146
      %p153 = scmp.eq.s32.totalorder %s31, 1
      %p154 = por %p152, %p153
      %p155 = scmp.ne.s32.totalorder %s146, %s147
      %p156 = scmp.eq.s32.totalorder %s31, 0
      %p157 = por %p155, %p156
      %p158 = scmp.ne.s32.totalorder %s146, %s147
      %p159 = scmp.eq.s32.totalorder %s32, 1
      %p160 = por %p158, %p159
      %p162 = scmp.ne.s32.totalorder %s147, %s161
      %p163 = scmp.eq.s32.totalorder %s32, 0
      %p164 = por %p162, %p163
      %s166 = sadd.s32 %s165, 1
      %p169 = scmp.eq.s32.totalorder %s26, 1
      %p170 = scmp.ne.s32.totalorder %s165, %s167
      %p171 = scmp.eq.s32.totalorder %s26, 0
      %p172 = por %p170, %p171
      %p173 = scmp.ne.s32.totalorder %s165, %s167
      %p174 = scmp.eq.s32.totalorder %s31, 1
      %p175 = por %p173, %p174
      %p176 = scmp.ne.s32.totalorder %s167, %s168
      %p177 = scmp.eq.s32.totalorder %s31, 0
      %p178 = por %p176, %p177
      %p179 = scmp.ne.s32.totalorder %s167, %s168
      %p180 = scmp.eq.s32.totalorder %s32, 1
      %p181 = por %p179, %p180
      %p183 = scmp.ne.s32.totalorder %s168, %s182
      %p184 = scmp.eq.s32.totalorder %s32, 0
      %p185 = por %p183, %p184
      %s187 = sadd.s32 %s186, 1
      %p190 = scmp.eq.s32.totalorder %s26, 1
      %p191 = scmp.ne.s32.totalorder %s186, %s188
      %p192 = scmp.eq.s32.totalorder %s26, 0
      %p193 = por %p191, %p192
      %p194 = scmp.ne.s32.totalorder %s186, %s188
      %p195 = scmp.eq.s32.totalorder %s31, 1
      %p196 = por %p194, %p195
      %p197 = scmp.ne.s32.totalorder %s188, %s189
      %p198 = scmp.eq.s32.totalorder %s31, 0
      %p199 = por %p197, %p198
      %p200 = scmp.ne.s32.totalorder %s188, %s189
      %p201 = scmp.eq.s32.totalorder %s32, 1
      %p202 = por %p200, %p201
      %p204 = scmp.ne.s32.totalorder %s189, %s203
      %p205 = scmp.eq.s32.totalorder %s32, 0
      %p206 = por %p204, %p205
      %s208 = sadd.s32 %s207, 1
      %p211 = scmp.eq.s32.totalorder %s26, 1
      %p212 = scmp.ne.s32.totalorder %s207, %s209
      %p213 = scmp.eq.s32.totalorder %s26, 0
      %p214 = por %p212, %p213
      %p215 = scmp.ne.s32.totalorder %s207, %s209
      %p216 = scmp.eq.s32.totalorder %s31, 1
      %p217 = por %p215, %p216
      %p218 = scmp.ne.s32.totalorder %s209, %s210
      %p219 = scmp.eq.s32.totalorder %s31, 0
      %p220 = por %p218, %p219
      %p221 = scmp.ne.s32.totalorder %s209, %s210
      %p222 = scmp.eq.s32.totalorder %s32, 1
      %p223 = por %p221, %p222
      %p225 = scmp.ne.s32.totalorder %s210, %s224
      %p226 = scmp.eq.s32.totalorder %s32, 0
      %p227 = por %p225, %p226
      %s229 = sadd.s32 %s228, 1
      %p232 = scmp.eq.s32.totalorder %s26, 1
      %p233 = scmp.ne.s32.totalorder %s228, %s230
      %p234 = scmp.eq.s32.totalorder %s26, 0
      %p235 = por %p233, %p234
      %p236 = scmp.ne.s32.totalorder %s228, %s230
      %p237 = scmp.eq.s32.totalorder %s31, 1
      %p238 = por %p236, %p237
      %p239 = scmp.ne.s32.totalorder %s230, %s231
      %p240 = scmp.eq.s32.totalorder %s31, 0
      %p241 = por %p239, %p240
      %p242 = scmp.ne.s32.totalorder %s230, %s231
      %p243 = scmp.eq.s32.totalorder %s32, 1
      %p244 = por %p242, %p243
      %p246 = scmp.ne.s32.totalorder %s231, %s245
      %p247 = scmp.eq.s32.totalorder %s32, 0
      %p248 = por %p246, %p247
      %s250 = sadd.s32 %s249, 1
      %p253 = scmp.eq.s32.totalorder %s26, 1
      %p254 = scmp.ne.s32.totalorder %s249, %s251
      %p255 = scmp.eq.s32.totalorder %s26, 0
      %p256 = por %p254, %p255
      %p257 = scmp.ne.s32.totalorder %s249, %s251
      %p258 = scmp.eq.s32.totalorder %s31, 1
      %p259 = por %p257, %p258
      %p260 = scmp.ne.s32.totalorder %s251, %s252
      %p261 = scmp.eq.s32.totalorder %s31, 0
      %p262 = por %p260, %p261
      %p263 = scmp.ne.s32.totalorder %s251, %s252
      %p264 = scmp.eq.s32.totalorder %s32, 1
      %p265 = por %p263, %p264
      %p267 = scmp.ne.s32.totalorder %s252, %s266
      %p268 = scmp.eq.s32.totalorder %s32, 0
      %p269 = por %p267, %p268
      %s270 = ssub.s32 %s26, %s33
      %p271 = scmp.eq.s32.totalorder %s270, 0
      %s273 = sadd.s32 %s272, 1
      %s274 = scalar_select %p271, %s272, %s273
      %p277 = pneg %p271
      %p278 = scmp.eq.s32.totalorder %s26, 1
      %p279 = por %p277, %p278
      %p280 = scmp.ne.s32.totalorder %s272, %s275
      %p281 = scmp.eq.s32.totalorder %s26, 0
      %p282 = por %p280, %p281
      %p283 = scmp.ne.s32.totalorder %s272, %s275
      %p284 = scmp.eq.s32.totalorder %s31, 1
      %p285 = por %p283, %p284
      %p286 = scmp.ne.s32.totalorder %s275, %s276
      %p287 = scmp.eq.s32.totalorder %s31, 0
      %p288 = por %p286, %p287
      %p289 = scmp.ne.s32.totalorder %s275, %s276
      %p290 = scmp.eq.s32.totalorder %s32, 1
      %p291 = por %p289, %p290
      %p293 = scmp.ne.s32.totalorder %s276, %s292
      %p294 = scmp.eq.s32.totalorder %s32, 0
      %p295 = por %p293, %p294
      %p296 = scmp.le.s32.totalorder 1, %s26
      %p297 = scmp.lt.s32.totalorder %s26, 3
      %p298 = pnand %p296, %p297
      %p299 = pneg %p298
      // Predicated region
      $region9: #{tpu_custom_call.1} parent=5 // pred_check
        _
      $region10: #{tpu_custom_call.1} parent=5 // pred_check_branch
        %301 = sbr.rel (%p298) target = $region12
      $region11: #{tpu_custom_call.1} parent=5 // pred_region
        %s302 = ssub.s32 %s26, 1
        // Predicated region
        $region13: #{tpu_custom_call.1} parent=11 // pred_check
          %p303 = pneg %p73
        $region14: #{tpu_custom_call.1} parent=11 // pred_check_branch
          %305 = sbr.rel (%p303) target = $region16
        $region15: #{tpu_custom_call.1} parent=11 // pred_region
          %s307 = ssub.s32 4096, 4096
          %308 = vsyncadd [#allocation6], %s307
          %s309 = sshll.u32 [#allocation5], 4
          %s310 = int_to_ptr.vmem [resolvable:$true] %s309
          %315 = dma.hbm_to_vmem [thread:$0]  %s1, 4096, %s310, [#allocation6], 128, 128, 8
        $region16: #{tpu_custom_call.1} parent=11 // pred_fallthru
          _
        // Predicated region
        $region17: #{tpu_custom_call.1} parent=11 // pred_check
          %p316 = pneg %p94
        $region18: #{tpu_custom_call.1} parent=11 // pred_check_branch
          %318 = sbr.rel (%p316) target = $region20
        $region19: #{tpu_custom_call.1} parent=11 // pred_region
          _
        $region20: #{tpu_custom_call.1} parent=11 // pred_fallthru
          _
        // Predicated region
        $region21: #{tpu_custom_call.1} parent=11 // pred_check
          %p319 = pneg %p115
        $region22: #{tpu_custom_call.1} parent=11 // pred_check_branch
          %321 = sbr.rel (%p319) target = $region24
        $region23: #{tpu_custom_call.1} parent=11 // pred_region
          %s323 = ssub.s32 4096, 4096
          %324 = vsyncadd [#allocation6], %s323
          %s325 = sshll.u32 [#allocation7], 4
          %s326 = int_to_ptr.vmem [resolvable:$true] %s325
          %331 = dma.hbm_to_vmem [thread:$0]  %s3, 4096, %s326, [#allocation6], 128, 128, 8
        $region24: #{tpu_custom_call.1} parent=11 // pred_fallthru
          _
        // Predicated region
        $region25: #{tpu_custom_call.1} parent=11 // pred_check
          %p332 = pneg %p136
        $region26: #{tpu_custom_call.1} parent=11 // pred_check_branch
          %334 = sbr.rel (%p332) target = $region28
        $region27: #{tpu_custom_call.1} parent=11 // pred_region
          _
        $region28: #{tpu_custom_call.1} parent=11 // pred_fallthru
          _
        // Predicated region
        $region29: #{tpu_custom_call.1} parent=11 // pred_check
          %p335 = pneg %p157
        $region30: #{tpu_custom_call.1} parent=11 // pred_check_branch
          %337 = sbr.rel (%p335) target = $region32
        $region31: #{tpu_custom_call.1} parent=11 // pred_region
          %s339 = ssub.s32 4096, 4096
          %340 = vsyncadd [#allocation9], %s339
          %s341 = sshll.u32 [#allocation8], 4
          %s342 = int_to_ptr.vmem [resolvable:$true] %s341
          %347 = dma.hbm_to_vmem [thread:$0]  %s5, 4096, %s342, [#allocation9], 128, 128, 8
        $region32: #{tpu_custom_call.1} parent=11 // pred_fallthru
          _
        // Predicated region
        $region33: #{tpu_custom_call.1} parent=11 // pred_check
          %p348 = pneg %p178
        $region34: #{tpu_custom_call.1} parent=11 // pred_check_branch
          %350 = sbr.rel (%p348) target = $region36
        $region35: #{tpu_custom_call.1} parent=11 // pred_region
          _
        $region36: #{tpu_custom_call.1} parent=11 // pred_fallthru
          _
        // Predicated region
        $region37: #{tpu_custom_call.1} parent=11 // pred_check
          %p351 = pneg %p199
        $region38: #{tpu_custom_call.1} parent=11 // pred_check_branch
          %353 = sbr.rel (%p351) target = $region40
        $region39: #{tpu_custom_call.1} parent=11 // pred_region
          %s355 = ssub.s32 4096, 4096
          %356 = vsyncadd [#allocation9], %s355
          %s357 = sshll.u32 [#allocation10], 4
          %s358 = int_to_ptr.vmem [resolvable:$true] %s357
          %363 = dma.hbm_to_vmem [thread:$0]  %s7, 4096, %s358, [#allocation9], 128, 128, 8
        $region40: #{tpu_custom_call.1} parent=11 // pred_fallthru
          _
        // Predicated region
        $region41: #{tpu_custom_call.1} parent=11 // pred_check
          %p364 = pneg %p220
        $region42: #{tpu_custom_call.1} parent=11 // pred_check_branch
          %366 = sbr.rel (%p364) target = $region44
        $region43: #{tpu_custom_call.1} parent=11 // pred_region
          _
        $region44: #{tpu_custom_call.1} parent=11 // pred_fallthru
          _
        // Predicated region
        $region45: #{tpu_custom_call.1} parent=11 // pred_check
          %p367 = pneg %p241
        $region46: #{tpu_custom_call.1} parent=11 // pred_check_branch
          %369 = sbr.rel (%p367) target = $region48
        $region47: #{tpu_custom_call.1} parent=11 // pred_region
          %s371 = ssub.s32 2048, 2048
          %372 = vsyncadd [#allocation12], %s371
          %s373 = sshll.u32 [#allocation11], 4
          %s374 = int_to_ptr.vmem [resolvable:$true] %s373
          %379 = dma.hbm_to_vmem [thread:$0]  %s9, 2048, %s374, [#allocation12], 64, 64, 4
        $region48: #{tpu_custom_call.1} parent=11 // pred_fallthru
          _
        // Predicated region
        $region49: #{tpu_custom_call.1} parent=11 // pred_check
          %p380 = pneg %p262
        $region50: #{tpu_custom_call.1} parent=11 // pred_check_branch
          %382 = sbr.rel (%p380) target = $region52
        $region51: #{tpu_custom_call.1} parent=11 // pred_region
          _
        $region52: #{tpu_custom_call.1} parent=11 // pred_fallthru
          _
      $region12: #{tpu_custom_call.1} parent=5 // pred_fallthru
        _
      %p383 = scmp.lt.s32.totalorder %s26, 2
      // Predicated region
      $region53: #{tpu_custom_call.1} parent=5 // pred_check
        %p384 = pneg %p383
      $region54: #{tpu_custom_call.1} parent=5 // pred_check_branch
        %386 = sbr.rel (%p384) target = $region56
      $region55: #{tpu_custom_call.1} parent=5 // pred_region
        // Predicated region
        $region57: #{tpu_custom_call.1} parent=55 // pred_check
          %p387 = pneg %p46
        $region58: #{tpu_custom_call.1} parent=55 // pred_check_branch
          %389 = sbr.rel (%p387) target = $region60
        $region59: #{tpu_custom_call.1} parent=55 // pred_region
          %s390 = sand.u32 %s36, 1
          %s391 = scalar_lea.sflag [#allocation3], %s390
          %s392 = sand.u32 %s36, 1
          %s393 = smul.addr %s392, 64
          %s394 = scalar_lea.vmem [#allocation2], %s393
          %s395 = smul.u32 8, %s26
          %s397 = ssub.s32 1024, 1024
          %398 = vsyncadd %s391, %s397
          %s399 = smul.addr %s395, 2
          %s400 = smul.addr %s399, 64
          %s401 = scalar_lea.hbm %s0, %s400
          %s402 = sshll.u32 %s394, 4
          %s403 = int_to_ptr.vmem [resolvable:$true] %s402
          %408 = dma.hbm_to_vmem [thread:$0]  %s401, 1024, %s403, %s391, 128, 128, 8
        $region60: #{tpu_custom_call.1} parent=55 // pred_fallthru
          _
      $region56: #{tpu_custom_call.1} parent=5 // pred_fallthru
        _
      %p409 = scmp.le.s32.totalorder 1, %s26
      %p410 = scmp.lt.s32.totalorder %s26, 3
      %p411 = pnand %p409, %p410
      %p412 = pneg %p411
      // Predicated region
      $region61: #{tpu_custom_call.1} parent=5 // pred_check
        _
      $region62: #{tpu_custom_call.1} parent=5 // pred_check_branch
        %414 = sbr.rel (%p411) target = $region64
      $region63: #{tpu_custom_call.1} parent=5 // pred_region
        %s415 = ssub.s32 %s26, 1
        %s416 = sand.u32 %s39, 1
        %s417 = scalar_lea.sflag [#allocation3], %s416
        %s418 = sand.u32 %s39, 1
        %s419 = smul.addr %s418, 64
        %s420 = scalar_lea.vmem [#allocation2], %s419
        // Predicated region
        $region65: #{tpu_custom_call.1} parent=63 // pred_check
          %p421 = pneg %p52
        $region66: #{tpu_custom_call.1} parent=63 // pred_check_branch
          %423 = sbr.rel (%p421) target = $region68
        $region67: #{tpu_custom_call.1} parent=63 // pred_region
          %424 = dma.done %s417, 1024
        $region68: #{tpu_custom_call.1} parent=63 // pred_fallthru
          _
        // Predicated region
        $region69: #{tpu_custom_call.1} parent=63 // pred_check
          %p425 = pneg %p73
        $region70: #{tpu_custom_call.1} parent=63 // pred_check_branch
          %427 = sbr.rel (%p425) target = $region72
        $region71: #{tpu_custom_call.1} parent=63 // pred_region
          %428 = dma.done [#allocation6], 4096
        $region72: #{tpu_custom_call.1} parent=63 // pred_fallthru
          _
        // Predicated region
        $region73: #{tpu_custom_call.1} parent=63 // pred_check
          %p429 = pneg %p115
        $region74: #{tpu_custom_call.1} parent=63 // pred_check_branch
          %431 = sbr.rel (%p429) target = $region76
        $region75: #{tpu_custom_call.1} parent=63 // pred_region
          %432 = dma.done [#allocation6], 4096
        $region76: #{tpu_custom_call.1} parent=63 // pred_fallthru
          _
        // Predicated region
        $region77: #{tpu_custom_call.1} parent=63 // pred_check
          %p433 = pneg %p157
        $region78: #{tpu_custom_call.1} parent=63 // pred_check_branch
          %435 = sbr.rel (%p433) target = $region80
        $region79: #{tpu_custom_call.1} parent=63 // pred_region
          %436 = dma.done [#allocation9], 4096
        $region80: #{tpu_custom_call.1} parent=63 // pred_fallthru
          _
        // Predicated region
        $region81: #{tpu_custom_call.1} parent=63 // pred_check
          %p437 = pneg %p199
        $region82: #{tpu_custom_call.1} parent=63 // pred_check_branch
          %439 = sbr.rel (%p437) target = $region84
        $region83: #{tpu_custom_call.1} parent=63 // pred_region
          %440 = dma.done [#allocation9], 4096
        $region84: #{tpu_custom_call.1} parent=63 // pred_fallthru
          _
        // Predicated region
        $region85: #{tpu_custom_call.1} parent=63 // pred_check
          %p441 = pneg %p241
        $region86: #{tpu_custom_call.1} parent=63 // pred_check_branch
          %443 = sbr.rel (%p441) target = $region88
        $region87: #{tpu_custom_call.1} parent=63 // pred_region
          %444 = dma.done [#allocation12], 2048
        $region88: #{tpu_custom_call.1} parent=63 // pred_fallthru
          _
        %s445 = sand.u32 %s39, 1
        %s446 = scalar_lea.sflag [#allocation3], %s445
        %s447 = sand.u32 %s39, 1
        %s448 = smul.addr %s447, 64
        %s449 = scalar_lea.vmem [#allocation2], %s448
        %p450 = pneg %p52
        %p451 = pneg %p49
        %p452 = pneg %p73
        %p453 = pneg %p70
        %p454 = pneg %p94
        %p455 = pneg %p91
        %p456 = pneg %p115
        %p457 = pneg %p112
        %p458 = pneg %p136
        %p459 = pneg %p133
        %p460 = pneg %p157
        %p461 = pneg %p154
        %p462 = pneg %p178
        %p463 = pneg %p175
        %p464 = pneg %p199
        %p465 = pneg %p196
        %p466 = pneg %p220
        %p467 = pneg %p217
        %p468 = pneg %p241
        %p469 = pneg %p238
        %p470 = pneg %p262
        %p471 = pneg %p259
        %p472 = pneg %p288
        %p473 = pneg %p285
        %s474 = sand.u32 %s275, 1
        %s475 = scalar_lea.sflag [#allocation4], %s474
        %s476 = sand.u32 %s275, 1
        %s477 = smul.addr %s476, 32
        %s478 = scalar_lea.vmem [#allocation13], %s477
        %s479 = smul.u32 8, %s31
        %s480 = smul.u32 8, %s31
        %v482 = vld [vmem:[%s420] sm:$0xff]
        %v483 = vld [vmem:[%s420 + $0x8] sm:$0xff]
        %v484 = vld [vmem:[%s420 + $0x10] sm:$0xff]
        %v485 = vld [vmem:[%s420 + $0x18] sm:$0xff]
        %v486 = vld [vmem:[%s420 + $0x20] sm:$0xff]
        %v487 = vld [vmem:[%s420 + $0x28] sm:$0xff]
        %v488 = vld [vmem:[%s420 + $0x30] sm:$0xff]
        %v489 = vld [vmem:[%s420 + $0x38] sm:$0xff]
        %v490 = vld [vmem:[#allocation5] sm:$0xff]
        %v491 = vld [vmem:[#allocation5 + $0x8] sm:$0xff]
        %v492 = vld [vmem:[#allocation5 + $0x10] sm:$0xff]
        %v493 = vld [vmem:[#allocation5 + $0x18] sm:$0xff]
        %v494 = vld [vmem:[#allocation5 + $0x20] sm:$0xff]
        %v495 = vld [vmem:[#allocation5 + $0x28] sm:$0xff]
        %v496 = vld [vmem:[#allocation5 + $0x30] sm:$0xff]
        %v497 = vld [vmem:[#allocation5 + $0x38] sm:$0xff]
        %v498 = vld [vmem:[#allocation5 + $0x40] sm:$0xff]
        %v499 = vld [vmem:[#allocation5 + $0x48] sm:$0xff]
        %v500 = vld [vmem:[#allocation5 + $0x50] sm:$0xff]
        %v501 = vld [vmem:[#allocation5 + $0x58] sm:$0xff]
        %v502 = vld [vmem:[#allocation5 + $0x60] sm:$0xff]
        %v503 = vld [vmem:[#allocation5 + $0x68] sm:$0xff]
        %v504 = vld [vmem:[#allocation5 + $0x70] sm:$0xff]
        %v505 = vld [vmem:[#allocation5 + $0x78] sm:$0xff]
        %v506 = vld [vmem:[#allocation5 + $0x80] sm:$0xff]
        %v507 = vld [vmem:[#allocation5 + $0x88] sm:$0xff]
        %v508 = vld [vmem:[#allocation5 + $0x90] sm:$0xff]
        %v509 = vld [vmem:[#allocation5 + $0x98] sm:$0xff]
        %v510 = vld [vmem:[#allocation5 + $0xa0] sm:$0xff]
        %v511 = vld [vmem:[#allocation5 + $0xa8] sm:$0xff]
        %v512 = vld [vmem:[#allocation5 + $0xb0] sm:$0xff]
        %v513 = vld [vmem:[#allocation5 + $0xb8] sm:$0xff]
        %v514 = vld [vmem:[#allocation5 + $0xc0] sm:$0xff]
        %v515 = vld [vmem:[#allocation5 + $0xc8] sm:$0xff]
        %v516 = vld [vmem:[#allocation5 + $0xd0] sm:$0xff]
        %v517 = vld [vmem:[#allocation5 + $0xd8] sm:$0xff]
        %v518 = vld [vmem:[#allocation5 + $0xe0] sm:$0xff]
        %v519 = vld [vmem:[#allocation5 + $0xe8] sm:$0xff]
        %v520 = vld [vmem:[#allocation5 + $0xf0] sm:$0xff]
        %v521 = vld [vmem:[#allocation5 + $0xf8] sm:$0xff]
        %v522 = vld [vmem:[%s2] sm:$0x3]
        %v524 = vlaneseq
        %v525 = vshrl.u32 %v524, 7
        %v526 = vsub.s32 0, %v525
        %v527 = vrot.slane %v522, %v526
        %v528 = vlaneseq
        %v529 = vshrl.u32 %v528, 7
        %v530 = vsub.s32 1, %v529
        %v531 = vrot.slane %v522, %v530
        %v542 = vunpack.c.l.b16 %v482
        %v543 = vunpack.c.h.b16 %v482
        %v544 = vunpack.c.l.b16 %v483
        %v545 = vunpack.c.h.b16 %v483
        %v546 = vunpack.c.l.b16 %v484
        %v547 = vunpack.c.h.b16 %v484
        %v548 = vunpack.c.l.b16 %v485
        %v549 = vunpack.c.h.b16 %v485
        %v550 = vunpack.c.l.b16 %v486
        %v551 = vunpack.c.h.b16 %v486
        %v552 = vunpack.c.l.b16 %v487
        %v553 = vunpack.c.h.b16 %v487
        %v554 = vunpack.c.l.b16 %v488
        %v555 = vunpack.c.h.b16 %v488
        %v556 = vunpack.c.l.b16 %v489
        %v557 = vunpack.c.h.b16 %v489
        %v558 = vpack.c.b16 %v544, %v542
        %v559 = vpack.c.b16 %v545, %v543
        %v560 = vpack.c.b16 %v548, %v546
        %v561 = vpack.c.b16 %v549, %v547
        %v562 = vpack.c.b16 %v552, %v550
        %v563 = vpack.c.b16 %v553, %v551
        %v564 = vpack.c.b16 %v556, %v554
        %v565 = vpack.c.b16 %v557, %v555
        %v606 = vunpack.c.l.b16 %v490
        %v607 = vunpack.c.h.b16 %v490
        %v608 = vunpack.c.l.b16 %v491
        %v609 = vunpack.c.h.b16 %v491
        %v610 = vunpack.c.l.b16 %v492
        %v611 = vunpack.c.h.b16 %v492
        %v612 = vunpack.c.l.b16 %v493
        %v613 = vunpack.c.h.b16 %v493
        %v614 = vunpack.c.l.b16 %v494
        %v615 = vunpack.c.h.b16 %v494
        %v616 = vunpack.c.l.b16 %v495
        %v617 = vunpack.c.h.b16 %v495
        %v618 = vunpack.c.l.b16 %v496
        %v619 = vunpack.c.h.b16 %v496
        %v620 = vunpack.c.l.b16 %v497
        %v621 = vunpack.c.h.b16 %v497
        %v622 = vunpack.c.l.b16 %v498
        %v623 = vunpack.c.h.b16 %v498
        %v624 = vunpack.c.l.b16 %v499
        %v625 = vunpack.c.h.b16 %v499
        %v626 = vunpack.c.l.b16 %v500
        %v627 = vunpack.c.h.b16 %v500
        %v628 = vunpack.c.l.b16 %v501
        %v629 = vunpack.c.h.b16 %v501
        %v630 = vunpack.c.l.b16 %v502
        %v631 = vunpack.c.h.b16 %v502
        %v632 = vunpack.c.l.b16 %v503
        %v633 = vunpack.c.h.b16 %v503
        %v634 = vunpack.c.l.b16 %v504
        %v635 = vunpack.c.h.b16 %v504
        %v636 = vunpack.c.l.b16 %v505
        %v637 = vunpack.c.h.b16 %v505
        %v638 = vunpack.c.l.b16 %v506
        %v639 = vunpack.c.h.b16 %v506
        %v640 = vunpack.c.l.b16 %v507
        %v641 = vunpack.c.h.b16 %v507
        %v642 = vunpack.c.l.b16 %v508
        %v643 = vunpack.c.h.b16 %v508
        %v644 = vunpack.c.l.b16 %v509
        %v645 = vunpack.c.h.b16 %v509
        %v646 = vunpack.c.l.b16 %v510
        %v647 = vunpack.c.h.b16 %v510
        %v648 = vunpack.c.l.b16 %v511
        %v649 = vunpack.c.h.b16 %v511
        %v650 = vunpack.c.l.b16 %v512
        %v651 = vunpack.c.h.b16 %v512
        %v652 = vunpack.c.l.b16 %v513
        %v653 = vunpack.c.h.b16 %v513
        %v654 = vunpack.c.l.b16 %v514
        %v655 = vunpack.c.h.b16 %v514
        %v656 = vunpack.c.l.b16 %v515
        %v657 = vunpack.c.h.b16 %v515
        %v658 = vunpack.c.l.b16 %v516
        %v659 = vunpack.c.h.b16 %v516
        %v660 = vunpack.c.l.b16 %v517
        %v661 = vunpack.c.h.b16 %v517
        %v662 = vunpack.c.l.b16 %v518
        %v663 = vunpack.c.h.b16 %v518
        %v664 = vunpack.c.l.b16 %v519
        %v665 = vunpack.c.h.b16 %v519
        %v666 = vunpack.c.l.b16 %v520
        %v667 = vunpack.c.h.b16 %v520
        %v668 = vunpack.c.l.b16 %v521
        %v669 = vunpack.c.h.b16 %v521
        %v670 = vpack.c.b16 %v608, %v606
        %v671 = vpack.c.b16 %v609, %v607
        %v672 = vpack.c.b16 %v612, %v610
        %v673 = vpack.c.b16 %v613, %v611
        %v674 = vpack.c.b16 %v616, %v614
        %v675 = vpack.c.b16 %v617, %v615
        %v676 = vpack.c.b16 %v620, %v618
        %v677 = vpack.c.b16 %v621, %v619
        %v678 = vpack.c.b16 %v624, %v622
        %v679 = vpack.c.b16 %v625, %v623
        %v680 = vpack.c.b16 %v628, %v626
        %v681 = vpack.c.b16 %v629, %v627
        %v682 = vpack.c.b16 %v632, %v630
        %v683 = vpack.c.b16 %v633, %v631
        %v684 = vpack.c.b16 %v636, %v634
        %v685 = vpack.c.b16 %v637, %v635
        %v686 = vpack.c.b16 %v640, %v638
        %v687 = vpack.c.b16 %v641, %v639
        %v688 = vpack.c.b16 %v644, %v642
        %v689 = vpack.c.b16 %v645, %v643
        %v690 = vpack.c.b16 %v648, %v646
        %v691 = vpack.c.b16 %v649, %v647
        %v692 = vpack.c.b16 %v652, %v650
        %v693 = vpack.c.b16 %v653, %v651
        %v694 = vpack.c.b16 %v656, %v654
        %v695 = vpack.c.b16 %v657, %v655
        %v696 = vpack.c.b16 %v660, %v658
        %v697 = vpack.c.b16 %v661, %v659
        %v698 = vpack.c.b16 %v664, %v662
        %v699 = vpack.c.b16 %v665, %v663
        %v700 = vpack.c.b16 %v668, %v666
        %v701 = vpack.c.b16 %v669, %v667
        %734 = vmatprep.subr.bf16.mxu0 %v671
        %735 = vmatpush1.bf16.msra.mxu0 %v670
        %736 = vmatprep.subr.bf16.mxu0 %v673
        %737 = vmatpush1.bf16.msra.mxu0 %v672
        %738 = vmatprep.subr.bf16.mxu0 %v675
        %739 = vmatpush1.bf16.msra.mxu0 %v674
        %740 = vmatprep.subr.bf16.mxu0 %v677
        %741 = vmatpush1.bf16.msra.mxu0 %v676
        %742 = vmatprep.subr.bf16.mxu0 %v679
        %743 = vmatpush1.bf16.msra.mxu0 %v678
        %744 = vmatprep.subr.bf16.mxu0 %v681
        %745 = vmatpush1.bf16.msra.mxu0 %v680
        %746 = vmatprep.subr.bf16.mxu0 %v683
        %747 = vmatpush1.bf16.msra.mxu0 %v682
        %748 = vmatprep.subr.bf16.mxu0 %v685
        %749 = vmatpush1.bf16.msra.mxu0 %v684
        %750 = vmatprep.subr.bf16.mxu0 %v687
        %751 = vmatpush1.bf16.msra.mxu0 %v686
        %752 = vmatprep.subr.bf16.mxu0 %v689
        %753 = vmatpush1.bf16.msra.mxu0 %v688
        %754 = vmatprep.subr.bf16.mxu0 %v691
        %755 = vmatpush1.bf16.msra.mxu0 %v690
        %756 = vmatprep.subr.bf16.mxu0 %v693
        %757 = vmatpush1.bf16.msra.mxu0 %v692
        %758 = vmatprep.subr.bf16.mxu0 %v695
        %759 = vmatpush1.bf16.msra.mxu0 %v694
        %760 = vmatprep.subr.bf16.mxu0 %v697
        %761 = vmatpush1.bf16.msra.mxu0 %v696
        %762 = vmatprep.subr.bf16.mxu0 %v699
        %763 = vmatpush1.bf16.msra.mxu0 %v698
        %764 = vmatprep.subr.bf16.mxu0 %v701
        %765 = vmatpush1.bf16.msra.mxu0 %v700
        %766 = vmatprep.mubr.bf16.mxu0 %v559
        %767 = vmatmul.mubr.bf16.gmra.mrb[0].mxu0 %v558
        %v768 = vpop.f32.mrb[0].mxu0
        %v769 = vadd.f32 %v527, %v768
        %v770 = vpop.f32.mrb[0].mxu0
        %v771 = vadd.f32 %v531, %v770
        %v772 = vpop.f32.mrb[0].mxu0
        %v773 = vadd.f32 %v527, %v772
        %v774 = vpop.f32.mrb[0].mxu0
        %v775 = vadd.f32 %v531, %v774
        %776 = vmatprep.mubr.bf16.mxu0 %v561
        %777 = vmatmul.mubr.bf16.gmra.mrb[0].mxu0 %v560
        %v778 = vpop.f32.mrb[0].mxu0
        %v779 = vadd.f32 %v527, %v778
        %v780 = vpop.f32.mrb[0].mxu0
        %v781 = vadd.f32 %v531, %v780
        %v782 = vpop.f32.mrb[0].mxu0
        %v783 = vadd.f32 %v527, %v782
        %v784 = vpop.f32.mrb[0].mxu0
        %v785 = vadd.f32 %v531, %v784
        %786 = vmatprep.mubr.bf16.mxu0 %v563
        %787 = vmatmul.mubr.bf16.gmra.mrb[0].mxu0 %v562
        %v788 = vpop.f32.mrb[0].mxu0
        %v789 = vadd.f32 %v527, %v788
        %v790 = vpop.f32.mrb[0].mxu0
        %v791 = vadd.f32 %v531, %v790
        %v792 = vpop.f32.mrb[0].mxu0
        %v793 = vadd.f32 %v527, %v792
        %v794 = vpop.f32.mrb[0].mxu0
        %v795 = vadd.f32 %v531, %v794
        %796 = vmatprep.mubr.bf16.mxu0 %v565
        %797 = vmatmul.mubr.bf16.gmra.mrb[0].mxu0 %v564
        %v798 = vpop.f32.mrb[0].mxu0
        %v799 = vadd.f32 %v527, %v798
        %v800 = vpop.f32.mrb[0].mxu0
        %v801 = vadd.f32 %v531, %v800
        %v802 = vpop.f32.mrb[0].mxu0
        %v803 = vadd.f32 %v527, %v802
        %v804 = vpop.f32.mrb[0].mxu0
        %v805 = vadd.f32 %v531, %v804
        %806 = vdwg.mxu0
        %v807 = vmax.f32 %v769, 0.0
        %v808 = vmax.f32 %v771, 0.0
        %v809 = vmax.f32 %v773, 0.0
        %v810 = vmax.f32 %v775, 0.0
        %v811 = vmax.f32 %v779, 0.0
        %v812 = vmax.f32 %v781, 0.0
        %v813 = vmax.f32 %v783, 0.0
        %v814 = vmax.f32 %v785, 0.0
        %v815 = vmax.f32 %v789, 0.0
        %v816 = vmax.f32 %v791, 0.0
        %v817 = vmax.f32 %v793, 0.0
        %v818 = vmax.f32 %v795, 0.0
        %v819 = vmax.f32 %v799, 0.0
        %v820 = vmax.f32 %v801, 0.0
        %v821 = vmax.f32 %v803, 0.0
        %v822 = vmax.f32 %v805, 0.0
        %v823 = vpack.c.bf16 %v809, %v807
        %v824 = vpack.c.bf16 %v810, %v808
        %v825 = vpack.c.bf16 %v813, %v811
        %v826 = vpack.c.bf16 %v814, %v812
        %v827 = vpack.c.bf16 %v817, %v815
        %v828 = vpack.c.bf16 %v818, %v816
        %v829 = vpack.c.bf16 %v821, %v819
        %v830 = vpack.c.bf16 %v822, %v820
        %v831 = vld [vmem:[#allocation7] sm:$0xff]
        %v832 = vld [vmem:[#allocation7 + $0x8] sm:$0xff]
        %v833 = vld [vmem:[#allocation7 + $0x10] sm:$0xff]
        %v834 = vld [vmem:[#allocation7 + $0x18] sm:$0xff]
        %v835 = vld [vmem:[#allocation7 + $0x20] sm:$0xff]
        %v836 = vld [vmem:[#allocation7 + $0x28] sm:$0xff]
        %v837 = vld [vmem:[#allocation7 + $0x30] sm:$0xff]
        %v838 = vld [vmem:[#allocation7 + $0x38] sm:$0xff]
        %v839 = vld [vmem:[#allocation7 + $0x40] sm:$0xff]
        %v840 = vld [vmem:[#allocation7 + $0x48] sm:$0xff]
        %v841 = vld [vmem:[#allocation7 + $0x50] sm:$0xff]
        %v842 = vld [vmem:[#allocation7 + $0x58] sm:$0xff]
        %v843 = vld [vmem:[#allocation7 + $0x60] sm:$0xff]
        %v844 = vld [vmem:[#allocation7 + $0x68] sm:$0xff]
        %v845 = vld [vmem:[#allocation7 + $0x70] sm:$0xff]
        %v846 = vld [vmem:[#allocation7 + $0x78] sm:$0xff]
        %v847 = vld [vmem:[#allocation7 + $0x80] sm:$0xff]
        %v848 = vld [vmem:[#allocation7 + $0x88] sm:$0xff]
        %v849 = vld [vmem:[#allocation7 + $0x90] sm:$0xff]
        %v850 = vld [vmem:[#allocation7 + $0x98] sm:$0xff]
        %v851 = vld [vmem:[#allocation7 + $0xa0] sm:$0xff]
        %v852 = vld [vmem:[#allocation7 + $0xa8] sm:$0xff]
        %v853 = vld [vmem:[#allocation7 + $0xb0] sm:$0xff]
        %v854 = vld [vmem:[#allocation7 + $0xb8] sm:$0xff]
        %v855 = vld [vmem:[#allocation7 + $0xc0] sm:$0xff]
        %v856 = vld [vmem:[#allocation7 + $0xc8] sm:$0xff]
        %v857 = vld [vmem:[#allocation7 + $0xd0] sm:$0xff]
        %v858 = vld [vmem:[#allocation7 + $0xd8] sm:$0xff]
        %v859 = vld [vmem:[#allocation7 + $0xe0] sm:$0xff]
        %v860 = vld [vmem:[#allocation7 + $0xe8] sm:$0xff]
        %v861 = vld [vmem:[#allocation7 + $0xf0] sm:$0xff]
        %v862 = vld [vmem:[#allocation7 + $0xf8] sm:$0xff]
        %v863 = vld [vmem:[%s4] sm:$0x3]
        %v865 = vlaneseq
        %v866 = vshrl.u32 %v865, 7
        %v867 = vsub.s32 0, %v866
        %v868 = vrot.slane %v863, %v867
        %v869 = vlaneseq
        %v870 = vshrl.u32 %v869, 7
        %v871 = vsub.s32 1, %v870
        %v872 = vrot.slane %v863, %v871
        %v907 = vunpack.c.l.b16 %v831
        %v908 = vunpack.c.h.b16 %v831
        %v909 = vunpack.c.l.b16 %v832
        %v910 = vunpack.c.h.b16 %v832
        %v911 = vunpack.c.l.b16 %v833
        %v912 = vunpack.c.h.b16 %v833
        %v913 = vunpack.c.l.b16 %v834
        %v914 = vunpack.c.h.b16 %v834
        %v915 = vunpack.c.l.b16 %v835
        %v916 = vunpack.c.h.b16 %v835
        %v917 = vunpack.c.l.b16 %v836
        %v918 = vunpack.c.h.b16 %v836
        %v919 = vunpack.c.l.b16 %v837
        %v920 = vunpack.c.h.b16 %v837
        %v921 = vunpack.c.l.b16 %v838
        %v922 = vunpack.c.h.b16 %v838
        %v923 = vunpack.c.l.b16 %v839
        %v924 = vunpack.c.h.b16 %v839
        %v925 = vunpack.c.l.b16 %v840
        %v926 = vunpack.c.h.b16 %v840
        %v927 = vunpack.c.l.b16 %v841
        %v928 = vunpack.c.h.b16 %v841
        %v929 = vunpack.c.l.b16 %v842
        %v930 = vunpack.c.h.b16 %v842
        %v931 = vunpack.c.l.b16 %v843
        %v932 = vunpack.c.h.b16 %v843
        %v933 = vunpack.c.l.b16 %v844
        %v934 = vunpack.c.h.b16 %v844
        %v935 = vunpack.c.l.b16 %v845
        %v936 = vunpack.c.h.b16 %v845
        %v937 = vunpack.c.l.b16 %v846
        %v938 = vunpack.c.h.b16 %v846
        %v939 = vunpack.c.l.b16 %v847
        %v940 = vunpack.c.h.b16 %v847
        %v941 = vunpack.c.l.b16 %v848
        %v942 = vunpack.c.h.b16 %v848
        %v943 = vunpack.c.l.b16 %v849
        %v944 = vunpack.c.h.b16 %v849
        %v945 = vunpack.c.l.b16 %v850
        %v946 = vunpack.c.h.b16 %v850
        %v947 = vunpack.c.l.b16 %v851
        %v948 = vunpack.c.h.b16 %v851
        %v949 = vunpack.c.l.b16 %v852
        %v950 = vunpack.c.h.b16 %v852
        %v951 = vunpack.c.l.b16 %v853
        %v952 = vunpack.c.h.b16 %v853
        %v953 = vunpack.c.l.b16 %v854
        %v954 = vunpack.c.h.b16 %v854
        %v955 = vunpack.c.l.b16 %v855
        %v956 = vunpack.c.h.b16 %v855
        %v957 = vunpack.c.l.b16 %v856
        %v958 = vunpack.c.h.b16 %v856
        %v959 = vunpack.c.l.b16 %v857
        %v960 = vunpack.c.h.b16 %v857
        %v961 = vunpack.c.l.b16 %v858
        %v962 = vunpack.c.h.b16 %v858
        %v963 = vunpack.c.l.b16 %v859
        %v964 = vunpack.c.h.b16 %v859
        %v965 = vunpack.c.l.b16 %v860
        %v966 = vunpack.c.h.b16 %v860
        %v967 = vunpack.c.l.b16 %v861
        %v968 = vunpack.c.h.b16 %v861
        %v969 = vunpack.c.l.b16 %v862
        %v970 = vunpack.c.h.b16 %v862
        %v971 = vpack.c.b16 %v909, %v907
        %v972 = vpack.c.b16 %v910, %v908
        %v973 = vpack.c.b16 %v913, %v911
        %v974 = vpack.c.b16 %v914, %v912
        %v975 = vpack.c.b16 %v917, %v915
        %v976 = vpack.c.b16 %v918, %v916
        %v977 = vpack.c.b16 %v921, %v919
        %v978 = vpack.c.b16 %v922, %v920
        %v979 = vpack.c.b16 %v925, %v923
        %v980 = vpack.c.b16 %v926, %v924
        %v981 = vpack.c.b16 %v929, %v927
        %v982 = vpack.c.b16 %v930, %v928
        %v983 = vpack.c.b16 %v933, %v931
        %v984 = vpack.c.b16 %v934, %v932
        %v985 = vpack.c.b16 %v937, %v935
        %v986 = vpack.c.b16 %v938, %v936
        %v987 = vpack.c.b16 %v941, %v939
        %v988 = vpack.c.b16 %v942, %v940
        %v989 = vpack.c.b16 %v945, %v943
        %v990 = vpack.c.b16 %v946, %v944
        %v991 = vpack.c.b16 %v949, %v947
        %v992 = vpack.c.b16 %v950, %v948
        %v993 = vpack.c.b16 %v953, %v951
        %v994 = vpack.c.b16 %v954, %v952
        %v995 = vpack.c.b16 %v957, %v955
        %v996 = vpack.c.b16 %v958, %v956
        %v997 = vpack.c.b16 %v961, %v959
        %v998 = vpack.c.b16 %v962, %v960
        %v999 = vpack.c.b16 %v965, %v963
        %v1000 = vpack.c.b16 %v966, %v964
        %v1001 = vpack.c.b16 %v969, %v967
        %v1002 = vpack.c.b16 %v970, %v968
        %1035 = vmatprep.subr.bf16.mxu0 %v972
        %1036 = vmatpush1.bf16.msra.mxu0 %v971
        %1037 = vmatprep.subr.bf16.mxu0 %v974
        %1038 = vmatpush1.bf16.msra.mxu0 %v973
        %1039 = vmatprep.subr.bf16.mxu0 %v976
        %1040 = vmatpush1.bf16.msra.mxu0 %v975
        %1041 = vmatprep.subr.bf16.mxu0 %v978
        %1042 = vmatpush1.bf16.msra.mxu0 %v977
        %1043 = vmatprep.subr.bf16.mxu0 %v980
        %1044 = vmatpush1.bf16.msra.mxu0 %v979
        %1045 = vmatprep.subr.bf16.mxu0 %v982
        %1046 = vmatpush1.bf16.msra.mxu0 %v981
        %1047 = vmatprep.subr.bf16.mxu0 %v984
        %1048 = vmatpush1.bf16.msra.mxu0 %v983
        %1049 = vmatprep.subr.bf16.mxu0 %v986
        %1050 = vmatpush1.bf16.msra.mxu0 %v985
        %1051 = vmatprep.subr.bf16.mxu0 %v988
        %1052 = vmatpush1.bf16.msra.mxu0 %v987
        %1053 = vmatprep.subr.bf16.mxu0 %v990
        %1054 = vmatpush1.bf16.msra.mxu0 %v989
        %1055 = vmatprep.subr.bf16.mxu0 %v992
        %1056 = vmatpush1.bf16.msra.mxu0 %v991
        %1057 = vmatprep.subr.bf16.mxu0 %v994
        %1058 = vmatpush1.bf16.msra.mxu0 %v993
        %1059 = vmatprep.subr.bf16.mxu0 %v996
        %1060 = vmatpush1.bf16.msra.mxu0 %v995
        %1061 = vmatprep.subr.bf16.mxu0 %v998
        %1062 = vmatpush1.bf16.msra.mxu0 %v997
        %1063 = vmatprep.subr.bf16.mxu0 %v1000
        %1064 = vmatpush1.bf16.msra.mxu0 %v999
        %1065 = vmatprep.subr.bf16.mxu0 %v1002
        %1066 = vmatpush1.bf16.msra.mxu0 %v1001
        %1067 = vmatprep.mubr.bf16.mxu0 %v824
        %1068 = vmatmul.mubr.bf16.gmra.mrb[0].mxu0 %v823
        %v1069 = vpop.f32.mrb[0].mxu0
        %v1070 = vadd.f32 %v868, %v1069
        %v1071 = vpop.f32.mrb[0].mxu0
        %v1072 = vadd.f32 %v872, %v1071
        %v1073 = vpop.f32.mrb[0].mxu0
        %v1074 = vadd.f32 %v868, %v1073
        %v1075 = vpop.f32.mrb[0].mxu0
        %v1076 = vadd.f32 %v872, %v1075
        %1077 = vmatprep.mubr.bf16.mxu0 %v826
        %1078 = vmatmul.mubr.bf16.gmra.mrb[0].mxu0 %v825
        %v1079 = vpop.f32.mrb[0].mxu0
        %v1080 = vadd.f32 %v868, %v1079
        %v1081 = vpop.f32.mrb[0].mxu0
        %v1082 = vadd.f32 %v872, %v1081
        %v1083 = vpop.f32.mrb[0].mxu0
        %v1084 = vadd.f32 %v868, %v1083
        %v1085 = vpop.f32.mrb[0].mxu0
        %v1086 = vadd.f32 %v872, %v1085
        %1087 = vmatprep.mubr.bf16.mxu0 %v828
        %1088 = vmatmul.mubr.bf16.gmra.mrb[0].mxu0 %v827
        %v1089 = vpop.f32.mrb[0].mxu0
        %v1090 = vadd.f32 %v868, %v1089
        %v1091 = vpop.f32.mrb[0].mxu0
        %v1092 = vadd.f32 %v872, %v1091
        %v1093 = vpop.f32.mrb[0].mxu0
        %v1094 = vadd.f32 %v868, %v1093
        %v1095 = vpop.f32.mrb[0].mxu0
        %v1096 = vadd.f32 %v872, %v1095
        %1097 = vmatprep.mubr.bf16.mxu0 %v830
        %1098 = vmatmul.mubr.bf16.gmra.mrb[0].mxu0 %v829
        %v1099 = vpop.f32.mrb[0].mxu0
        %v1100 = vadd.f32 %v868, %v1099
        %v1101 = vpop.f32.mrb[0].mxu0
        %v1102 = vadd.f32 %v872, %v1101
        %v1103 = vpop.f32.mrb[0].mxu0
        %v1104 = vadd.f32 %v868, %v1103
        %v1105 = vpop.f32.mrb[0].mxu0
        %v1106 = vadd.f32 %v872, %v1105
        %1107 = vdwg.mxu0
        %v1108 = vmax.f32 %v1070, 0.0
        %v1109 = vmax.f32 %v1072, 0.0
        %v1110 = vmax.f32 %v1074, 0.0
        %v1111 = vmax.f32 %v1076, 0.0
        %v1112 = vmax.f32 %v1080, 0.0
        %v1113 = vmax.f32 %v1082, 0.0
        %v1114 = vmax.f32 %v1084, 0.0
        %v1115 = vmax.f32 %v1086, 0.0
        %v1116 = vmax.f32 %v1090, 0.0
        %v1117 = vmax.f32 %v1092, 0.0
        %v1118 = vmax.f32 %v1094, 0.0
        %v1119 = vmax.f32 %v1096, 0.0
        %v1120 = vmax.f32 %v1100, 0.0
        %v1121 = vmax.f32 %v1102, 0.0
        %v1122 = vmax.f32 %v1104, 0.0
        %v1123 = vmax.f32 %v1106, 0.0
        %v1124 = vpack.c.bf16 %v1110, %v1108
        %v1125 = vpack.c.bf16 %v1111, %v1109
        %v1126 = vpack.c.bf16 %v1114, %v1112
        %v1127 = vpack.c.bf16 %v1115, %v1113
        %v1128 = vpack.c.bf16 %v1118, %v1116
        %v1129 = vpack.c.bf16 %v1119, %v1117
        %v1130 = vpack.c.bf16 %v1122, %v1120
        %v1131 = vpack.c.bf16 %v1123, %v1121
        %v1132 = vld [vmem:[#allocation8] sm:$0xff]
        %v1133 = vld [vmem:[#allocation8 + $0x8] sm:$0xff]
        %v1134 = vld [vmem:[#allocation8 + $0x10] sm:$0xff]
        %v1135 = vld [vmem:[#allocation8 + $0x18] sm:$0xff]
        %v1136 = vld [vmem:[#allocation8 + $0x20] sm:$0xff]
        %v1137 = vld [vmem:[#allocation8 + $0x28] sm:$0xff]
        %v1138 = vld [vmem:[#allocation8 + $0x30] sm:$0xff]
        %v1139 = vld [vmem:[#allocation8 + $0x38] sm:$0xff]
        %v1140 = vld [vmem:[#allocation8 + $0x40] sm:$0xff]
        %v1141 = vld [vmem:[#allocation8 + $0x48] sm:$0xff]
        %v1142 = vld [vmem:[#allocation8 + $0x50] sm:$0xff]
        %v1143 = vld [vmem:[#allocation8 + $0x58] sm:$0xff]
        %v1144 = vld [vmem:[#allocation8 + $0x60] sm:$0xff]
        %v1145 = vld [vmem:[#allocation8 + $0x68] sm:$0xff]
        %v1146 = vld [vmem:[#allocation8 + $0x70] sm:$0xff]
        %v1147 = vld [vmem:[#allocation8 + $0x78] sm:$0xff]
        %v1148 = vld [vmem:[#allocation8 + $0x80] sm:$0xff]
        %v1149 = vld [vmem:[#allocation8 + $0x88] sm:$0xff]
        %v1150 = vld [vmem:[#allocation8 + $0x90] sm:$0xff]
        %v1151 = vld [vmem:[#allocation8 + $0x98] sm:$0xff]
        %v1152 = vld [vmem:[#allocation8 + $0xa0] sm:$0xff]
        %v1153 = vld [vmem:[#allocation8 + $0xa8] sm:$0xff]
        %v1154 = vld [vmem:[#allocation8 + $0xb0] sm:$0xff]
        %v1155 = vld [vmem:[#allocation8 + $0xb8] sm:$0xff]
        %v1156 = vld [vmem:[#allocation8 + $0xc0] sm:$0xff]
        %v1157 = vld [vmem:[#allocation8 + $0xc8] sm:$0xff]
        %v1158 = vld [vmem:[#allocation8 + $0xd0] sm:$0xff]
        %v1159 = vld [vmem:[#allocation8 + $0xd8] sm:$0xff]
        %v1160 = vld [vmem:[#allocation8 + $0xe0] sm:$0xff]
        %v1161 = vld [vmem:[#allocation8 + $0xe8] sm:$0xff]
        %v1162 = vld [vmem:[#allocation8 + $0xf0] sm:$0xff]
        %v1163 = vld [vmem:[#allocation8 + $0xf8] sm:$0xff]
        %v1164 = vld [vmem:[%s6] sm:$0x3]
        %v1166 = vlaneseq
        %v1167 = vshrl.u32 %v1166, 7
        %v1168 = vsub.s32 0, %v1167
        %v1169 = vrot.slane %v1164, %v1168
        %v1170 = vlaneseq
        %v1171 = vshrl.u32 %v1170, 7
        %v1172 = vsub.s32 1, %v1171
        %v1173 = vrot.slane %v1164, %v1172
        %v1208 = vunpack.c.l.b16 %v1132
        %v1209 = vunpack.c.h.b16 %v1132
        %v1210 = vunpack.c.l.b16 %v1133
        %v1211 = vunpack.c.h.b16 %v1133
        %v1212 = vunpack.c.l.b16 %v1134
        %v1213 = vunpack.c.h.b16 %v1134
        %v1214 = vunpack.c.l.b16 %v1135
        %v1215 = vunpack.c.h.b16 %v1135
        %v1216 = vunpack.c.l.b16 %v1136
        %v1217 = vunpack.c.h.b16 %v1136
        %v1218 = vunpack.c.l.b16 %v1137
        %v1219 = vunpack.c.h.b16 %v1137
        %v1220 = vunpack.c.l.b16 %v1138
        %v1221 = vunpack.c.h.b16 %v1138
        %v1222 = vunpack.c.l.b16 %v1139
        %v1223 = vunpack.c.h.b16 %v1139
        %v1224 = vunpack.c.l.b16 %v1140
        %v1225 = vunpack.c.h.b16 %v1140
        %v1226 = vunpack.c.l.b16 %v1141
        %v1227 = vunpack.c.h.b16 %v1141
        %v1228 = vunpack.c.l.b16 %v1142
        %v1229 = vunpack.c.h.b16 %v1142
        %v1230 = vunpack.c.l.b16 %v1143
        %v1231 = vunpack.c.h.b16 %v1143
        %v1232 = vunpack.c.l.b16 %v1144
        %v1233 = vunpack.c.h.b16 %v1144
        %v1234 = vunpack.c.l.b16 %v1145
        %v1235 = vunpack.c.h.b16 %v1145
        %v1236 = vunpack.c.l.b16 %v1146
        %v1237 = vunpack.c.h.b16 %v1146
        %v1238 = vunpack.c.l.b16 %v1147
        %v1239 = vunpack.c.h.b16 %v1147
        %v1240 = vunpack.c.l.b16 %v1148
        %v1241 = vunpack.c.h.b16 %v1148
        %v1242 = vunpack.c.l.b16 %v1149
        %v1243 = vunpack.c.h.b16 %v1149
        %v1244 = vunpack.c.l.b16 %v1150
        %v1245 = vunpack.c.h.b16 %v1150
        %v1246 = vunpack.c.l.b16 %v1151
        %v1247 = vunpack.c.h.b16 %v1151
        %v1248 = vunpack.c.l.b16 %v1152
        %v1249 = vunpack.c.h.b16 %v1152
        %v1250 = vunpack.c.l.b16 %v1153
        %v1251 = vunpack.c.h.b16 %v1153
        %v1252 = vunpack.c.l.b16 %v1154
        %v1253 = vunpack.c.h.b16 %v1154
        %v1254 = vunpack.c.l.b16 %v1155
        %v1255 = vunpack.c.h.b16 %v1155
        %v1256 = vunpack.c.l.b16 %v1156
        %v1257 = vunpack.c.h.b16 %v1156
        %v1258 = vunpack.c.l.b16 %v1157
        %v1259 = vunpack.c.h.b16 %v1157
        %v1260 = vunpack.c.l.b16 %v1158
        %v1261 = vunpack.c.h.b16 %v1158
        %v1262 = vunpack.c.l.b16 %v1159
        %v1263 = vunpack.c.h.b16 %v1159
        %v1264 = vunpack.c.l.b16 %v1160
        %v1265 = vunpack.c.h.b16 %v1160
        %v1266 = vunpack.c.l.b16 %v1161
        %v1267 = vunpack.c.h.b16 %v1161
        %v1268 = vunpack.c.l.b16 %v1162
        %v1269 = vunpack.c.h.b16 %v1162
        %v1270 = vunpack.c.l.b16 %v1163
        %v1271 = vunpack.c.h.b16 %v1163
        %v1272 = vpack.c.b16 %v1210, %v1208
        %v1273 = vpack.c.b16 %v1211, %v1209
        %v1274 = vpack.c.b16 %v1214, %v1212
        %v1275 = vpack.c.b16 %v1215, %v1213
        %v1276 = vpack.c.b16 %v1218, %v1216
        %v1277 = vpack.c.b16 %v1219, %v1217
        %v1278 = vpack.c.b16 %v1222, %v1220
        %v1279 = vpack.c.b16 %v1223, %v1221
        %v1280 = vpack.c.b16 %v1226, %v1224
        %v1281 = vpack.c.b16 %v1227, %v1225
        %v1282 = vpack.c.b16 %v1230, %v1228
        %v1283 = vpack.c.b16 %v1231, %v1229
        %v1284 = vpack.c.b16 %v1234, %v1232
        %v1285 = vpack.c.b16 %v1235, %v1233
        %v1286 = vpack.c.b16 %v1238, %v1236
        %v1287 = vpack.c.b16 %v1239, %v1237
        %v1288 = vpack.c.b16 %v1242, %v1240
        %v1289 = vpack.c.b16 %v1243, %v1241
        %v1290 = vpack.c.b16 %v1246, %v1244
        %v1291 = vpack.c.b16 %v1247, %v1245
        %v1292 = vpack.c.b16 %v1250, %v1248
        %v1293 = vpack.c.b16 %v1251, %v1249
        %v1294 = vpack.c.b16 %v1254, %v1252
        %v1295 = vpack.c.b16 %v1255, %v1253
        %v1296 = vpack.c.b16 %v1258, %v1256
        %v1297 = vpack.c.b16 %v1259, %v1257
        %v1298 = vpack.c.b16 %v1262, %v1260
        %v1299 = vpack.c.b16 %v1263, %v1261
        %v1300 = vpack.c.b16 %v1266, %v1264
        %v1301 = vpack.c.b16 %v1267, %v1265
        %v1302 = vpack.c.b16 %v1270, %v1268
        %v1303 = vpack.c.b16 %v1271, %v1269
        %1336 = vmatprep.subr.bf16.mxu0 %v1273
        %1337 = vmatpush1.bf16.msra.mxu0 %v1272
        %1338 = vmatprep.subr.bf16.mxu0 %v1275
        %1339 = vmatpush1.bf16.msra.mxu0 %v1274
        %1340 = vmatprep.subr.bf16.mxu0 %v1277
        %1341 = vmatpush1.bf16.msra.mxu0 %v1276
        %1342 = vmatprep.subr.bf16.mxu0 %v1279
        %1343 = vmatpush1.bf16.msra.mxu0 %v1278
        %1344 = vmatprep.subr.bf16.mxu0 %v1281
        %1345 = vmatpush1.bf16.msra.mxu0 %v1280
        %1346 = vmatprep.subr.bf16.mxu0 %v1283
        %1347 = vmatpush1.bf16.msra.mxu0 %v1282
        %1348 = vmatprep.subr.bf16.mxu0 %v1285
        %1349 = vmatpush1.bf16.msra.mxu0 %v1284
        %1350 = vmatprep.subr.bf16.mxu0 %v1287
        %1351 = vmatpush1.bf16.msra.mxu0 %v1286
        %1352 = vmatprep.subr.bf16.mxu0 %v1289
        %1353 = vmatpush1.bf16.msra.mxu0 %v1288
        %1354 = vmatprep.subr.bf16.mxu0 %v1291
        %1355 = vmatpush1.bf16.msra.mxu0 %v1290
        %1356 = vmatprep.subr.bf16.mxu0 %v1293
        %1357 = vmatpush1.bf16.msra.mxu0 %v1292
        %1358 = vmatprep.subr.bf16.mxu0 %v1295
        %1359 = vmatpush1.bf16.msra.mxu0 %v1294
        %1360 = vmatprep.subr.bf16.mxu0 %v1297
        %1361 = vmatpush1.bf16.msra.mxu0 %v1296
        %1362 = vmatprep.subr.bf16.mxu0 %v1299
        %1363 = vmatpush1.bf16.msra.mxu0 %v1298
        %1364 = vmatprep.subr.bf16.mxu0 %v1301
        %1365 = vmatpush1.bf16.msra.mxu0 %v1300
        %1366 = vmatprep.subr.bf16.mxu0 %v1303
        %1367 = vmatpush1.bf16.msra.mxu0 %v1302
        %1368 = vmatprep.mubr.bf16.mxu0 %v1125
        %1369 = vmatmul.mubr.bf16.gmra.mrb[0].mxu0 %v1124
        %v1370 = vpop.f32.mrb[0].mxu0
        %v1371 = vadd.f32 %v1169, %v1370
        %v1372 = vpop.f32.mrb[0].mxu0
        %v1373 = vadd.f32 %v1173, %v1372
        %v1374 = vpop.f32.mrb[0].mxu0
        %v1375 = vadd.f32 %v1169, %v1374
        %v1376 = vpop.f32.mrb[0].mxu0
        %v1377 = vadd.f32 %v1173, %v1376
        %1378 = vmatprep.mubr.bf16.mxu0 %v1127
        %1379 = vmatmul.mubr.bf16.gmra.mrb[0].mxu0 %v1126
        %v1380 = vpop.f32.mrb[0].mxu0
        %v1381 = vadd.f32 %v1169, %v1380
        %v1382 = vpop.f32.mrb[0].mxu0
        %v1383 = vadd.f32 %v1173, %v1382
        %v1384 = vpop.f32.mrb[0].mxu0
        %v1385 = vadd.f32 %v1169, %v1384
        %v1386 = vpop.f32.mrb[0].mxu0
        %v1387 = vadd.f32 %v1173, %v1386
        %1388 = vmatprep.mubr.bf16.mxu0 %v1129
        %1389 = vmatmul.mubr.bf16.gmra.mrb[0].mxu0 %v1128
        %v1390 = vpop.f32.mrb[0].mxu0
        %v1391 = vadd.f32 %v1169, %v1390
        %v1392 = vpop.f32.mrb[0].mxu0
        %v1393 = vadd.f32 %v1173, %v1392
        %v1394 = vpop.f32.mrb[0].mxu0
        %v1395 = vadd.f32 %v1169, %v1394
        %v1396 = vpop.f32.mrb[0].mxu0
        %v1397 = vadd.f32 %v1173, %v1396
        %1398 = vmatprep.mubr.bf16.mxu0 %v1131
        %1399 = vmatmul.mubr.bf16.gmra.mrb[0].mxu0 %v1130
        %v1400 = vpop.f32.mrb[0].mxu0
        %v1401 = vadd.f32 %v1169, %v1400
        %v1402 = vpop.f32.mrb[0].mxu0
        %v1403 = vadd.f32 %v1173, %v1402
        %v1404 = vpop.f32.mrb[0].mxu0
        %v1405 = vadd.f32 %v1169, %v1404
        %v1406 = vpop.f32.mrb[0].mxu0
        %v1407 = vadd.f32 %v1173, %v1406
        %1408 = vdwg.mxu0
        %v1409 = vmax.f32 %v1371, 0.0
        %v1410 = vmax.f32 %v1373, 0.0
        %v1411 = vmax.f32 %v1375, 0.0
        %v1412 = vmax.f32 %v1377, 0.0
        %v1413 = vmax.f32 %v1381, 0.0
        %v1414 = vmax.f32 %v1383, 0.0
        %v1415 = vmax.f32 %v1385, 0.0
        %v1416 = vmax.f32 %v1387, 0.0
        %v1417 = vmax.f32 %v1391, 0.0
        %v1418 = vmax.f32 %v1393, 0.0
        %v1419 = vmax.f32 %v1395, 0.0
        %v1420 = vmax.f32 %v1397, 0.0
        %v1421 = vmax.f32 %v1401, 0.0
        %v1422 = vmax.f32 %v1403, 0.0
        %v1423 = vmax.f32 %v1405, 0.0
        %v1424 = vmax.f32 %v1407, 0.0
        %v1425 = vpack.c.bf16 %v1411, %v1409
        %v1426 = vpack.c.bf16 %v1412, %v1410
        %v1427 = vpack.c.bf16 %v1415, %v1413
        %v1428 = vpack.c.bf16 %v1416, %v1414
        %v1429 = vpack.c.bf16 %v1419, %v1417
        %v1430 = vpack.c.bf16 %v1420, %v1418
        %v1431 = vpack.c.bf16 %v1423, %v1421
        %v1432 = vpack.c.bf16 %v1424, %v1422
        %v1433 = vld [vmem:[#allocation10] sm:$0xff]
        %v1434 = vld [vmem:[#allocation10 + $0x8] sm:$0xff]
        %v1435 = vld [vmem:[#allocation10 + $0x10] sm:$0xff]
        %v1436 = vld [vmem:[#allocation10 + $0x18] sm:$0xff]
        %v1437 = vld [vmem:[#allocation10 + $0x20] sm:$0xff]
        %v1438 = vld [vmem:[#allocation10 + $0x28] sm:$0xff]
        %v1439 = vld [vmem:[#allocation10 + $0x30] sm:$0xff]
        %v1440 = vld [vmem:[#allocation10 + $0x38] sm:$0xff]
        %v1441 = vld [vmem:[#allocation10 + $0x40] sm:$0xff]
        %v1442 = vld [vmem:[#allocation10 + $0x48] sm:$0xff]
        %v1443 = vld [vmem:[#allocation10 + $0x50] sm:$0xff]
        %v1444 = vld [vmem:[#allocation10 + $0x58] sm:$0xff]
        %v1445 = vld [vmem:[#allocation10 + $0x60] sm:$0xff]
        %v1446 = vld [vmem:[#allocation10 + $0x68] sm:$0xff]
        %v1447 = vld [vmem:[#allocation10 + $0x70] sm:$0xff]
        %v1448 = vld [vmem:[#allocation10 + $0x78] sm:$0xff]
        %v1449 = vld [vmem:[#allocation10 + $0x80] sm:$0xff]
        %v1450 = vld [vmem:[#allocation10 + $0x88] sm:$0xff]
        %v1451 = vld [vmem:[#allocation10 + $0x90] sm:$0xff]
        %v1452 = vld [vmem:[#allocation10 + $0x98] sm:$0xff]
        %v1453 = vld [vmem:[#allocation10 + $0xa0] sm:$0xff]
        %v1454 = vld [vmem:[#allocation10 + $0xa8] sm:$0xff]
        %v1455 = vld [vmem:[#allocation10 + $0xb0] sm:$0xff]
        %v1456 = vld [vmem:[#allocation10 + $0xb8] sm:$0xff]
        %v1457 = vld [vmem:[#allocation10 + $0xc0] sm:$0xff]
        %v1458 = vld [vmem:[#allocation10 + $0xc8] sm:$0xff]
        %v1459 = vld [vmem:[#allocation10 + $0xd0] sm:$0xff]
        %v1460 = vld [vmem:[#allocation10 + $0xd8] sm:$0xff]
        %v1461 = vld [vmem:[#allocation10 + $0xe0] sm:$0xff]
        %v1462 = vld [vmem:[#allocation10 + $0xe8] sm:$0xff]
        %v1463 = vld [vmem:[#allocation10 + $0xf0] sm:$0xff]
        %v1464 = vld [vmem:[#allocation10 + $0xf8] sm:$0xff]
        %v1465 = vld [vmem:[%s8] sm:$0x3]
        %v1467 = vlaneseq
        %v1468 = vshrl.u32 %v1467, 7
        %v1469 = vsub.s32 0, %v1468
        %v1470 = vrot.slane %v1465, %v1469
        %v1471 = vlaneseq
        %v1472 = vshrl.u32 %v1471, 7
        %v1473 = vsub.s32 1, %v1472
        %v1474 = vrot.slane %v1465, %v1473
        %v1509 = vunpack.c.l.b16 %v1433
        %v1510 = vunpack.c.h.b16 %v1433
        %v1511 = vunpack.c.l.b16 %v1434
        %v1512 = vunpack.c.h.b16 %v1434
        %v1513 = vunpack.c.l.b16 %v1435
        %v1514 = vunpack.c.h.b16 %v1435
        %v1515 = vunpack.c.l.b16 %v1436
        %v1516 = vunpack.c.h.b16 %v1436
        %v1517 = vunpack.c.l.b16 %v1437
        %v1518 = vunpack.c.h.b16 %v1437
        %v1519 = vunpack.c.l.b16 %v1438
        %v1520 = vunpack.c.h.b16 %v1438
        %v1521 = vunpack.c.l.b16 %v1439
        %v1522 = vunpack.c.h.b16 %v1439
        %v1523 = vunpack.c.l.b16 %v1440
        %v1524 = vunpack.c.h.b16 %v1440
        %v1525 = vunpack.c.l.b16 %v1441
        %v1526 = vunpack.c.h.b16 %v1441
        %v1527 = vunpack.c.l.b16 %v1442
        %v1528 = vunpack.c.h.b16 %v1442
        %v1529 = vunpack.c.l.b16 %v1443
        %v1530 = vunpack.c.h.b16 %v1443
        %v1531 = vunpack.c.l.b16 %v1444
        %v1532 = vunpack.c.h.b16 %v1444
        %v1533 = vunpack.c.l.b16 %v1445
        %v1534 = vunpack.c.h.b16 %v1445
        %v1535 = vunpack.c.l.b16 %v1446
        %v1536 = vunpack.c.h.b16 %v1446
        %v1537 = vunpack.c.l.b16 %v1447
        %v1538 = vunpack.c.h.b16 %v1447
        %v1539 = vunpack.c.l.b16 %v1448
        %v1540 = vunpack.c.h.b16 %v1448
        %v1541 = vunpack.c.l.b16 %v1449
        %v1542 = vunpack.c.h.b16 %v1449
        %v1543 = vunpack.c.l.b16 %v1450
        %v1544 = vunpack.c.h.b16 %v1450
        %v1545 = vunpack.c.l.b16 %v1451
        %v1546 = vunpack.c.h.b16 %v1451
        %v1547 = vunpack.c.l.b16 %v1452
        %v1548 = vunpack.c.h.b16 %v1452
        %v1549 = vunpack.c.l.b16 %v1453
        %v1550 = vunpack.c.h.b16 %v1453
        %v1551 = vunpack.c.l.b16 %v1454
        %v1552 = vunpack.c.h.b16 %v1454
        %v1553 = vunpack.c.l.b16 %v1455
        %v1554 = vunpack.c.h.b16 %v1455
        %v1555 = vunpack.c.l.b16 %v1456
        %v1556 = vunpack.c.h.b16 %v1456
        %v1557 = vunpack.c.l.b16 %v1457
        %v1558 = vunpack.c.h.b16 %v1457
        %v1559 = vunpack.c.l.b16 %v1458
        %v1560 = vunpack.c.h.b16 %v1458
        %v1561 = vunpack.c.l.b16 %v1459
        %v1562 = vunpack.c.h.b16 %v1459
        %v1563 = vunpack.c.l.b16 %v1460
        %v1564 = vunpack.c.h.b16 %v1460
        %v1565 = vunpack.c.l.b16 %v1461
        %v1566 = vunpack.c.h.b16 %v1461
        %v1567 = vunpack.c.l.b16 %v1462
        %v1568 = vunpack.c.h.b16 %v1462
        %v1569 = vunpack.c.l.b16 %v1463
        %v1570 = vunpack.c.h.b16 %v1463
        %v1571 = vunpack.c.l.b16 %v1464
        %v1572 = vunpack.c.h.b16 %v1464
        %v1573 = vpack.c.b16 %v1511, %v1509
        %v1574 = vpack.c.b16 %v1512, %v1510
        %v1575 = vpack.c.b16 %v1515, %v1513
        %v1576 = vpack.c.b16 %v1516, %v1514
        %v1577 = vpack.c.b16 %v1519, %v1517
        %v1578 = vpack.c.b16 %v1520, %v1518
        %v1579 = vpack.c.b16 %v1523, %v1521
        %v1580 = vpack.c.b16 %v1524, %v1522
        %v1581 = vpack.c.b16 %v1527, %v1525
        %v1582 = vpack.c.b16 %v1528, %v1526
        %v1583 = vpack.c.b16 %v1531, %v1529
        %v1584 = vpack.c.b16 %v1532, %v1530
        %v1585 = vpack.c.b16 %v1535, %v1533
        %v1586 = vpack.c.b16 %v1536, %v1534
        %v1587 = vpack.c.b16 %v1539, %v1537
        %v1588 = vpack.c.b16 %v1540, %v1538
        %v1589 = vpack.c.b16 %v1543, %v1541
        %v1590 = vpack.c.b16 %v1544, %v1542
        %v1591 = vpack.c.b16 %v1547, %v1545
        %v1592 = vpack.c.b16 %v1548, %v1546
        %v1593 = vpack.c.b16 %v1551, %v1549
        %v1594 = vpack.c.b16 %v1552, %v1550
        %v1595 = vpack.c.b16 %v1555, %v1553
        %v1596 = vpack.c.b16 %v1556, %v1554
        %v1597 = vpack.c.b16 %v1559, %v1557
        %v1598 = vpack.c.b16 %v1560, %v1558
        %v1599 = vpack.c.b16 %v1563, %v1561
        %v1600 = vpack.c.b16 %v1564, %v1562
        %v1601 = vpack.c.b16 %v1567, %v1565
        %v1602 = vpack.c.b16 %v1568, %v1566
        %v1603 = vpack.c.b16 %v1571, %v1569
        %v1604 = vpack.c.b16 %v1572, %v1570
        %1637 = vmatprep.subr.bf16.mxu0 %v1574
        %1638 = vmatpush1.bf16.msra.mxu0 %v1573
        %1639 = vmatprep.subr.bf16.mxu0 %v1576
        %1640 = vmatpush1.bf16.msra.mxu0 %v1575
        %1641 = vmatprep.subr.bf16.mxu0 %v1578
        %1642 = vmatpush1.bf16.msra.mxu0 %v1577
        %1643 = vmatprep.subr.bf16.mxu0 %v1580
        %1644 = vmatpush1.bf16.msra.mxu0 %v1579
        %1645 = vmatprep.subr.bf16.mxu0 %v1582
        %1646 = vmatpush1.bf16.msra.mxu0 %v1581
        %1647 = vmatprep.subr.bf16.mxu0 %v1584
        %1648 = vmatpush1.bf16.msra.mxu0 %v1583
        %1649 = vmatprep.subr.bf16.mxu0 %v1586
        %1650 = vmatpush1.bf16.msra.mxu0 %v1585
        %1651 = vmatprep.subr.bf16.mxu0 %v1588
        %1652 = vmatpush1.bf16.msra.mxu0 %v1587
        %1653 = vmatprep.subr.bf16.mxu0 %v1590
        %1654 = vmatpush1.bf16.msra.mxu0 %v1589
        %1655 = vmatprep.subr.bf16.mxu0 %v1592
        %1656 = vmatpush1.bf16.msra.mxu0 %v1591
        %1657 = vmatprep.subr.bf16.mxu0 %v1594
        %1658 = vmatpush1.bf16.msra.mxu0 %v1593
        %1659 = vmatprep.subr.bf16.mxu0 %v1596
        %1660 = vmatpush1.bf16.msra.mxu0 %v1595
        %1661 = vmatprep.subr.bf16.mxu0 %v1598
        %1662 = vmatpush1.bf16.msra.mxu0 %v1597
        %1663 = vmatprep.subr.bf16.mxu0 %v1600
        %1664 = vmatpush1.bf16.msra.mxu0 %v1599
        %1665 = vmatprep.subr.bf16.mxu0 %v1602
        %1666 = vmatpush1.bf16.msra.mxu0 %v1601
        %1667 = vmatprep.subr.bf16.mxu0 %v1604
        %1668 = vmatpush1.bf16.msra.mxu0 %v1603
        %1669 = vmatprep.mubr.bf16.mxu0 %v1426
        %1670 = vmatmul.mubr.bf16.gmra.mrb[0].mxu0 %v1425
        %v1671 = vpop.f32.mrb[0].mxu0
        %v1672 = vadd.f32 %v1470, %v1671
        %v1673 = vpop.f32.mrb[0].mxu0
        %v1674 = vadd.f32 %v1474, %v1673
        %v1675 = vpop.f32.mrb[0].mxu0
        %v1676 = vadd.f32 %v1470, %v1675
        %v1677 = vpop.f32.mrb[0].mxu0
        %v1678 = vadd.f32 %v1474, %v1677
        %1679 = vmatprep.mubr.bf16.mxu0 %v1428
        %1680 = vmatmul.mubr.bf16.gmra.mrb[0].mxu0 %v1427
        %v1681 = vpop.f32.mrb[0].mxu0
        %v1682 = vadd.f32 %v1470, %v1681
        %v1683 = vpop.f32.mrb[0].mxu0
        %v1684 = vadd.f32 %v1474, %v1683
        %v1685 = vpop.f32.mrb[0].mxu0
        %v1686 = vadd.f32 %v1470, %v1685
        %v1687 = vpop.f32.mrb[0].mxu0
        %v1688 = vadd.f32 %v1474, %v1687
        %1689 = vmatprep.mubr.bf16.mxu0 %v1430
        %1690 = vmatmul.mubr.bf16.gmra.mrb[0].mxu0 %v1429
        %v1691 = vpop.f32.mrb[0].mxu0
        %v1692 = vadd.f32 %v1470, %v1691
        %v1693 = vpop.f32.mrb[0].mxu0
        %v1694 = vadd.f32 %v1474, %v1693
        %v1695 = vpop.f32.mrb[0].mxu0
        %v1696 = vadd.f32 %v1470, %v1695
        %v1697 = vpop.f32.mrb[0].mxu0
        %v1698 = vadd.f32 %v1474, %v1697
        %1699 = vmatprep.mubr.bf16.mxu0 %v1432
        %1700 = vmatmul.mubr.bf16.gmra.mrb[0].mxu0 %v1431
        %v1701 = vpop.f32.mrb[0].mxu0
        %v1702 = vadd.f32 %v1470, %v1701
        %v1703 = vpop.f32.mrb[0].mxu0
        %v1704 = vadd.f32 %v1474, %v1703
        %v1705 = vpop.f32.mrb[0].mxu0
        %v1706 = vadd.f32 %v1470, %v1705
        %v1707 = vpop.f32.mrb[0].mxu0
        %v1708 = vadd.f32 %v1474, %v1707
        %1709 = vdwg.mxu0
        %v1710 = vmax.f32 %v1672, 0.0
        %v1711 = vmax.f32 %v1674, 0.0
        %v1712 = vmax.f32 %v1676, 0.0
        %v1713 = vmax.f32 %v1678, 0.0
        %v1714 = vmax.f32 %v1682, 0.0
        %v1715 = vmax.f32 %v1684, 0.0
        %v1716 = vmax.f32 %v1686, 0.0
        %v1717 = vmax.f32 %v1688, 0.0
        %v1718 = vmax.f32 %v1692, 0.0
        %v1719 = vmax.f32 %v1694, 0.0
        %v1720 = vmax.f32 %v1696, 0.0
        %v1721 = vmax.f32 %v1698, 0.0
        %v1722 = vmax.f32 %v1702, 0.0
        %v1723 = vmax.f32 %v1704, 0.0
        %v1724 = vmax.f32 %v1706, 0.0
        %v1725 = vmax.f32 %v1708, 0.0
        %v1726 = vpack.c.bf16 %v1712, %v1710
        %v1727 = vpack.c.bf16 %v1713, %v1711
        %v1728 = vpack.c.bf16 %v1716, %v1714
        %v1729 = vpack.c.bf16 %v1717, %v1715
        %v1730 = vpack.c.bf16 %v1720, %v1718
        %v1731 = vpack.c.bf16 %v1721, %v1719
        %v1732 = vpack.c.bf16 %v1724, %v1722
        %v1733 = vpack.c.bf16 %v1725, %v1723
        %v1734 = vld [vmem:[#allocation11] sm:$0xf]
        %v1735 = vld [vmem:[#allocation11 + $0x4] sm:$0xf]
        %v1736 = vld [vmem:[#allocation11 + $0x8] sm:$0xf]
        %v1737 = vld [vmem:[#allocation11 + $0xc] sm:$0xf]
        %v1738 = vld [vmem:[#allocation11 + $0x10] sm:$0xf]
        %v1739 = vld [vmem:[#allocation11 + $0x14] sm:$0xf]
        %v1740 = vld [vmem:[#allocation11 + $0x18] sm:$0xf]
        %v1741 = vld [vmem:[#allocation11 + $0x1c] sm:$0xf]
        %v1742 = vld [vmem:[#allocation11 + $0x20] sm:$0xf]
        %v1743 = vld [vmem:[#allocation11 + $0x24] sm:$0xf]
        %v1744 = vld [vmem:[#allocation11 + $0x28] sm:$0xf]
        %v1745 = vld [vmem:[#allocation11 + $0x2c] sm:$0xf]
        %v1746 = vld [vmem:[#allocation11 + $0x30] sm:$0xf]
        %v1747 = vld [vmem:[#allocation11 + $0x34] sm:$0xf]
        %v1748 = vld [vmem:[#allocation11 + $0x38] sm:$0xf]
        %v1749 = vld [vmem:[#allocation11 + $0x3c] sm:$0xf]
        %v1750 = vld [vmem:[#allocation11 + $0x40] sm:$0xf]
        %v1751 = vld [vmem:[#allocation11 + $0x44] sm:$0xf]
        %v1752 = vld [vmem:[#allocation11 + $0x48] sm:$0xf]
        %v1753 = vld [vmem:[#allocation11 + $0x4c] sm:$0xf]
        %v1754 = vld [vmem:[#allocation11 + $0x50] sm:$0xf]
        %v1755 = vld [vmem:[#allocation11 + $0x54] sm:$0xf]
        %v1756 = vld [vmem:[#allocation11 + $0x58] sm:$0xf]
        %v1757 = vld [vmem:[#allocation11 + $0x5c] sm:$0xf]
        %v1758 = vld [vmem:[#allocation11 + $0x60] sm:$0xf]
        %v1759 = vld [vmem:[#allocation11 + $0x64] sm:$0xf]
        %v1760 = vld [vmem:[#allocation11 + $0x68] sm:$0xf]
        %v1761 = vld [vmem:[#allocation11 + $0x6c] sm:$0xf]
        %v1762 = vld [vmem:[#allocation11 + $0x70] sm:$0xf]
        %v1763 = vld [vmem:[#allocation11 + $0x74] sm:$0xf]
        %v1764 = vld [vmem:[#allocation11 + $0x78] sm:$0xf]
        %v1765 = vld [vmem:[#allocation11 + $0x7c] sm:$0xf]
        %v1766 = vld [vmem:[%s10] sm:$0x1]
        %v1768 = vlaneseq
        %v1769 = vshrl.u32 %v1768, 7
        %v1770 = vsub.s32 0, %v1769
        %v1771 = vrot.slane %v1766, %v1770
        %v1805 = vunpack.c.l.b16 %v1734
        %v1806 = vunpack.c.l.b16 %v1735
        %v1807 = vunpack.c.l.b16 %v1736
        %v1808 = vunpack.c.l.b16 %v1737
        %v1809 = vunpack.c.l.b16 %v1738
        %v1810 = vunpack.c.l.b16 %v1739
        %v1811 = vunpack.c.l.b16 %v1740
        %v1812 = vunpack.c.l.b16 %v1741
        %v1813 = vunpack.c.l.b16 %v1742
        %v1814 = vunpack.c.l.b16 %v1743
        %v1815 = vunpack.c.l.b16 %v1744
        %v1816 = vunpack.c.l.b16 %v1745
        %v1817 = vunpack.c.l.b16 %v1746
        %v1818 = vunpack.c.l.b16 %v1747
        %v1819 = vunpack.c.l.b16 %v1748
        %v1820 = vunpack.c.l.b16 %v1749
        %v1821 = vunpack.c.l.b16 %v1750
        %v1822 = vunpack.c.l.b16 %v1751
        %v1823 = vunpack.c.l.b16 %v1752
        %v1824 = vunpack.c.l.b16 %v1753
        %v1825 = vunpack.c.l.b16 %v1754
        %v1826 = vunpack.c.l.b16 %v1755
        %v1827 = vunpack.c.l.b16 %v1756
        %v1828 = vunpack.c.l.b16 %v1757
        %v1829 = vunpack.c.l.b16 %v1758
        %v1830 = vunpack.c.l.b16 %v1759
        %v1831 = vunpack.c.l.b16 %v1760
        %v1832 = vunpack.c.l.b16 %v1761
        %v1833 = vunpack.c.l.b16 %v1762
        %v1834 = vunpack.c.l.b16 %v1763
        %v1835 = vunpack.c.l.b16 %v1764
        %v1836 = vunpack.c.l.b16 %v1765
        %v1837 = vpack.c.b16 %v1806, %v1805
        %v1838 = vpack.c.b16 %v1808, %v1807
        %v1839 = vpack.c.b16 %v1810, %v1809
        %v1840 = vpack.c.b16 %v1812, %v1811
        %v1841 = vpack.c.b16 %v1814, %v1813
        %v1842 = vpack.c.b16 %v1816, %v1815
        %v1843 = vpack.c.b16 %v1818, %v1817
        %v1844 = vpack.c.b16 %v1820, %v1819
        %v1845 = vpack.c.b16 %v1822, %v1821
        %v1846 = vpack.c.b16 %v1824, %v1823
        %v1847 = vpack.c.b16 %v1826, %v1825
        %v1848 = vpack.c.b16 %v1828, %v1827
        %v1849 = vpack.c.b16 %v1830, %v1829
        %v1850 = vpack.c.b16 %v1832, %v1831
        %v1851 = vpack.c.b16 %v1834, %v1833
        %v1852 = vpack.c.b16 %v1836, %v1835
        %1869 = vmatprep.subr.bf16.mxu0 0
        %1870 = vmatpush1.bf16.msra.mxu0 %v1837
        %1871 = vmatprep.subr.bf16.mxu0 0
        %1872 = vmatpush1.bf16.msra.mxu0 %v1838
        %1873 = vmatprep.subr.bf16.mxu0 0
        %1874 = vmatpush1.bf16.msra.mxu0 %v1839
        %1875 = vmatprep.subr.bf16.mxu0 0
        %1876 = vmatpush1.bf16.msra.mxu0 %v1840
        %1877 = vmatprep.subr.bf16.mxu0 0
        %1878 = vmatpush1.bf16.msra.mxu0 %v1841
        %1879 = vmatprep.subr.bf16.mxu0 0
        %1880 = vmatpush1.bf16.msra.mxu0 %v1842
        %1881 = vmatprep.subr.bf16.mxu0 0
        %1882 = vmatpush1.bf16.msra.mxu0 %v1843
        %1883 = vmatprep.subr.bf16.mxu0 0
        %1884 = vmatpush1.bf16.msra.mxu0 %v1844
        %1885 = vmatprep.subr.bf16.mxu0 0
        %1886 = vmatpush1.bf16.msra.mxu0 %v1845
        %1887 = vmatprep.subr.bf16.mxu0 0
        %1888 = vmatpush1.bf16.msra.mxu0 %v1846
        %1889 = vmatprep.subr.bf16.mxu0 0
        %1890 = vmatpush1.bf16.msra.mxu0 %v1847
        %1891 = vmatprep.subr.bf16.mxu0 0
        %1892 = vmatpush1.bf16.msra.mxu0 %v1848
        %1893 = vmatprep.subr.bf16.mxu0 0
        %1894 = vmatpush1.bf16.msra.mxu0 %v1849
        %1895 = vmatprep.subr.bf16.mxu0 0
        %1896 = vmatpush1.bf16.msra.mxu0 %v1850
        %1897 = vmatprep.subr.bf16.mxu0 0
        %1898 = vmatpush1.bf16.msra.mxu0 %v1851
        %1899 = vmatprep.subr.bf16.mxu0 0
        %1900 = vmatpush1.bf16.msra.mxu0 %v1852
        %1901 = vmatprep.mubr.bf16.mxu0 %v1727
        %1902 = vmatmul.mubr.bf16.gmra.mrb[0].mxu0 %v1726
        %v1903 = vpop.f32.mrb[0].mxu0
        %v1904 = vadd.f32 %v1771, %v1903
        %v1905 = vpop.f32.mrb[0].mxu0
        %v1906 = vpop.f32.mrb[0].mxu0
        %v1907 = vadd.f32 %v1771, %v1906
        %v1908 = vpop.f32.mrb[0].mxu0
        %1909 = vmatprep.mubr.bf16.mxu0 %v1729
        %1910 = vmatmul.mubr.bf16.gmra.mrb[0].mxu0 %v1728
        %v1911 = vpop.f32.mrb[0].mxu0
        %v1912 = vadd.f32 %v1771, %v1911
        %v1913 = vpop.f32.mrb[0].mxu0
        %v1914 = vpop.f32.mrb[0].mxu0
        %v1915 = vadd.f32 %v1771, %v1914
        %v1916 = vpop.f32.mrb[0].mxu0
        %1917 = vmatprep.mubr.bf16.mxu0 %v1731
        %1918 = vmatmul.mubr.bf16.gmra.mrb[0].mxu0 %v1730
        %v1919 = vpop.f32.mrb[0].mxu0
        %v1920 = vadd.f32 %v1771, %v1919
        %v1921 = vpop.f32.mrb[0].mxu0
        %v1922 = vpop.f32.mrb[0].mxu0
        %v1923 = vadd.f32 %v1771, %v1922
        %v1924 = vpop.f32.mrb[0].mxu0
        %1925 = vmatprep.mubr.bf16.mxu0 %v1733
        %1926 = vmatmul.mubr.bf16.gmra.mrb[0].mxu0 %v1732
        %v1927 = vpop.f32.mrb[0].mxu0
        %v1928 = vadd.f32 %v1771, %v1927
        %v1929 = vpop.f32.mrb[0].mxu0
        %v1930 = vpop.f32.mrb[0].mxu0
        %v1931 = vadd.f32 %v1771, %v1930
        %v1932 = vpop.f32.mrb[0].mxu0
        %1933 = vdwg.mxu0
        %v1934 = vpack.c.bf16 %v1907, %v1904
        %v1935 = vpack.c.bf16 %v1915, %v1912
        %v1936 = vpack.c.bf16 %v1923, %v1920
        %v1937 = vpack.c.bf16 %v1931, %v1928
        %v1942 = vunpack.c.l.b16 %v1934
        %v1943 = vunpack.c.h.b16 %v1934
        %v1944 = vunpack.c.l.b16 %v1935
        %v1945 = vunpack.c.h.b16 %v1935
        %v1946 = vunpack.c.l.b16 %v1936
        %v1947 = vunpack.c.h.b16 %v1936
        %v1948 = vunpack.c.l.b16 %v1937
        %v1949 = vunpack.c.h.b16 %v1937
        %v1950 = vpack.c.b16 %v1942, %v1942
        %v1951 = vpack.c.b16 %v1943, %v1943
        %v1952 = vpack.c.b16 %v1944, %v1944
        %v1953 = vpack.c.b16 %v1945, %v1945
        %v1954 = vpack.c.b16 %v1946, %v1946
        %v1955 = vpack.c.b16 %v1947, %v1947
        %v1956 = vpack.c.b16 %v1948, %v1948
        %v1957 = vpack.c.b16 %v1949, %v1949
        %1966 = vst [vmem:[%s478] sm:$0xf] %v1950
        %1967 = vst [vmem:[%s478 + $0x4] sm:$0xf] %v1951
        %1968 = vst [vmem:[%s478 + $0x8] sm:$0xf] %v1952
        %1969 = vst [vmem:[%s478 + $0xc] sm:$0xf] %v1953
        %1970 = vst [vmem:[%s478 + $0x10] sm:$0xf] %v1954
        %1971 = vst [vmem:[%s478 + $0x14] sm:$0xf] %v1955
        %1972 = vst [vmem:[%s478 + $0x18] sm:$0xf] %v1956
        %1973 = vst [vmem:[%s478 + $0x1c] sm:$0xf] %v1957
        %s1974 = sand.u32 %s275, 1
        %s1975 = scalar_lea.sflag [#allocation4], %s1974
        %s1976 = sand.u32 %s275, 1
        %s1977 = smul.addr %s1976, 32
        %s1978 = scalar_lea.vmem [#allocation13], %s1977
        // Predicated region
        $region89: #{tpu_custom_call.1} parent=63 // pred_check
          %p1979 = pneg %p285
        $region90: #{tpu_custom_call.1} parent=63 // pred_check_branch
          %1981 = sbr.rel (%p1979) target = $region92
        $region91: #{tpu_custom_call.1} parent=63 // pred_region
          %s1982 = smul.u32 8, %s31
          %s1984 = ssub.s32 512, 512
          %1985 = vsyncadd %s1975, %s1984
          %s1986 = smul.addr %s1982, 64
          %s1987 = scalar_lea.hbm %s11, %s1986
          %s1988 = sshll.u32 %s1978, 4
          %s1989 = int_to_ptr.vmem [resolvable:$true] %s1988
          %1994 = dma.vmem_to_hbm [thread:$0]  %s1989, 512, %s1987, %s1975, 64, 64, 4
        $region92: #{tpu_custom_call.1} parent=63 // pred_fallthru
          _
      $region64: #{tpu_custom_call.1} parent=5 // pred_fallthru
        _
      %p1995 = scmp.le.s32.totalorder 2, %s26
      // Predicated region
      $region93: #{tpu_custom_call.1} parent=5 // pred_check
        %p1996 = pneg %p1995
      $region94: #{tpu_custom_call.1} parent=5 // pred_check_branch
        %1998 = sbr.rel (%p1996) target = $region96
      $region95: #{tpu_custom_call.1} parent=5 // pred_region
        %s1999 = ssub.s32 %s26, 2
        // Predicated region
        $region97: #{tpu_custom_call.1} parent=95 // pred_check
          %p2000 = pneg %p291
        $region98: #{tpu_custom_call.1} parent=95 // pred_check_branch
          %2002 = sbr.rel (%p2000) target = $region100
        $region99: #{tpu_custom_call.1} parent=95 // pred_region
          %s2003 = sand.u32 %s276, 1
          %s2004 = scalar_lea.sflag [#allocation4], %s2003
          %s2005 = sand.u32 %s276, 1
          %s2006 = smul.addr %s2005, 32
          %s2007 = scalar_lea.vmem [#allocation13], %s2006
          %2008 = dma.done %s2004, 512
        $region100: #{tpu_custom_call.1} parent=95 // pred_fallthru
          _
      $region96: #{tpu_custom_call.1} parent=5 // pred_fallthru
        _
    $region6: #{tpu_custom_call.1} parent=1 // loop_footer
      %s30 = sadd.s32 1, %s26
    $region7: #{tpu_custom_call.1} parent=1 // loop_footer_branch
      %25 = sbr.rel target = $region3
    $region8: #{tpu_custom_call.1} parent=1 // loop_exit
      _
    %2009 = vsyncpa [#allocation3], 1
    %s2010 = scalar_lea.sflag [#allocation3], 1
    %2011 = vsyncpa %s2010, 1
    %2012 = vsyncpa [#allocation6], 1
    %2013 = vsyncpa [#allocation9], 1
    %2014 = vsyncpa [#allocation12], 1
    %2015 = vsyncpa [#allocation4], 1
    %s2016 = scalar_lea.sflag [#allocation4], 1
    %2017 = vsyncpa %s2016, 1

</llo_original>
